<compile_context>
chip_gen: v6e
topology: v6e:2x2x1
jax: 0.10.0
libtpu: 0.0.40
codegen_flags: <defaults>
</compile_context>

<pallas_src>
import math

import jax
import jax.numpy as jnp
from jax.experimental import pallas as pl
from jax.experimental.pallas import tpu as pltpu


def _round_up(x, m):
    return ((x + m - 1) // m) * m


def gcn_gru_kernel(a_ref, xsrc_ref, xhid_ref, wlin_ref, blin_ref,
                   wg_ref, bg_ref, out_ref, acc_ref, hx_ref):
    """Tiled: sum-aggregation over k tiles -> linear + ReLU -> fused GRU cell."""
    k = pl.program_id(1)
    fp = out_ref.shape[1]          # padded feature width (multiple of 128)

    @pl.when(k == 0)
    def _init():
        acc_ref[...] = jnp.zeros_like(acc_ref)

    # Partial aggregation: A[i-tile, k-tile] @ X[k-tile]  (bf16 MXU, f32 acc).
    acc_ref[...] += jnp.dot(a_ref[...], xsrc_ref[...],
                            preferred_element_type=jnp.float32)

    @pl.when(k == pl.num_programs(1) - 1)
    def _epilogue():
        x_f32 = xhid_ref[...]                                   # [TM, Fp] f32

        # Linear + ReLU.
        h = jnp.dot(acc_ref[...].astype(jnp.bfloat16), wlin_ref[...],
                    preferred_element_type=jnp.float32)
        h = jnp.maximum(h + blin_ref[...], 0.0)                 # [TM, Fp] f32

        # Fused GRU gate matmul on [h | x] -> [ r | z | i_n | h_n ].
        hx_ref[:, 0:fp] = h.astype(jnp.bfloat16)
        hx_ref[:, fp:2 * fp] = x_f32.astype(jnp.bfloat16)
        g = jnp.dot(hx_ref[...], wg_ref[...],
                    preferred_element_type=jnp.float32) + bg_ref[...]  # [TM, 4Fp]

        r = jax.nn.sigmoid(g[:, 0:fp])
        z = jax.nn.sigmoid(g[:, fp:2 * fp])
        n = jnp.tanh(g[:, 2 * fp:3 * fp] + r * g[:, 3 * fp:4 * fp])
        out_ref[...] = (1.0 - z) * n + z * x_f32


def gcn_layer_with_gru(adj, features, w_lin, b_lin, w_ih, b_ih, w_hh, b_hh,
                       *, tm=512, tk=1024):
    """adj: [N,N] dense {0,1} adjacency (row i sums its in-neighbors);
    features: [N,F]; w_lin: [F,F]; b_lin: [F]; w_ih/w_hh: [3F,F]; b_ih/b_hh: [3F]."""
    N, F = features.shape
    f32, bf16 = jnp.float32, jnp.bfloat16

    Fp = _round_up(F, 128)                       # lane-dense feature width
    TM = min(tm, _round_up(N, 128))              # node-row tile
    TK = min(tk, _round_up(N, 128))              # reduction tile over A cols
    Np = _round_up(N, math.lcm(TM, TK))          # padded node count

    def pad2(a, rows, cols, dtype):
        out = jnp.zeros((rows, cols), dtype)
        return out.at[:a.shape[0], :a.shape[1]].set(a.astype(dtype))

    # --- inputs -----------------------------------------------------------
    a_p = pad2(adj, Np, Np, f32).astype(bf16)        # {0,1}: exact in bf16
    x_f32_p = pad2(features, Np, Fp, f32)            # hidden state (f32 blend)
    x_bf_p = x_f32_p.astype(bf16)                    # aggregation source

    # --- linear weights ----------------------------------------------------
    wlin_p = pad2(w_lin.T, Fp, Fp, f32).astype(bf16)             # [in, out]
    blin_p = jnp.zeros((1, Fp), f32).at[0, :F].set(b_lin.astype(f32))

    # --- fused GRU gate weight: [h | x] @ wg -> [ r | z | i_n | h_n ] -------
    wih_t = w_ih.T.astype(f32)                                   # [F, 3F]
    whh_t = w_hh.T.astype(f32)                                   # [F, 3F]
    wg = jnp.zeros((2 * Fp, 4 * Fp), f32)
    # rows 0..F   <- h  (input-to-hidden weights)
    wg = wg.at[:F, 0 * Fp:0 * Fp + F].set(wih_t[:, 0:F])              # r
    wg = wg.at[:F, 1 * Fp:1 * Fp + F].set(wih_t[:, F:2 * F])          # z
    wg = wg.at[:F, 2 * Fp:2 * Fp + F].set(wih_t[:, 2 * F:3 * F])      # i_n
    # rows Fp..Fp+F <- x (hidden-to-hidden weights)
    wg = wg.at[Fp:Fp + F, 0 * Fp:0 * Fp + F].set(whh_t[:, 0:F])          # r
    wg = wg.at[Fp:Fp + F, 1 * Fp:1 * Fp + F].set(whh_t[:, F:2 * F])      # z
    wg = wg.at[Fp:Fp + F, 3 * Fp:3 * Fp + F].set(whh_t[:, 2 * F:3 * F])  # h_n
    wg_p = wg.astype(bf16)

    bg = jnp.zeros((4 * Fp,), f32)
    bg = bg.at[0 * Fp:0 * Fp + F].set((b_ih[0:F] + b_hh[0:F]).astype(f32))
    bg = bg.at[1 * Fp:1 * Fp + F].set((b_ih[F:2 * F] + b_hh[F:2 * F]).astype(f32))
    bg = bg.at[2 * Fp:2 * Fp + F].set(b_ih[2 * F:3 * F].astype(f32))
    bg = bg.at[3 * Fp:3 * Fp + F].set(b_hh[2 * F:3 * F].astype(f32))
    bg_p = bg.reshape(1, 4 * Fp)

    grid = (Np // TM, Np // TK)

    cost = pl.CostEstimate(
        flops=2 * Np * Np * Fp + 2 * Np * Fp * Fp + 2 * Np * (2 * Fp) * (4 * Fp),
        transcendentals=3 * Np * Fp,
        bytes_accessed=(a_p.size * 2 + x_bf_p.size * 2 + x_f32_p.size * 4
                        + wlin_p.size * 2 + wg_p.size * 2
                        + blin_p.size * 4 + bg_p.size * 4 + Np * Fp * 4),
    )

    out_p = pl.pallas_call(
        gcn_gru_kernel,
        out_shape=jax.ShapeDtypeStruct((Np, Fp), f32),
        grid_spec=pltpu.PrefetchScalarGridSpec(
            num_scalar_prefetch=0,
            grid=grid,
            in_specs=[
                pl.BlockSpec((TM, TK), lambda i, k: (i, k)),           # A tile
                pl.BlockSpec((TK, Fp), lambda i, k: (k, 0)),           # X source (bf16)
                pl.BlockSpec((TM, Fp), lambda i, k: (i, 0)),           # X hidden (f32)
                pl.BlockSpec((Fp, Fp), lambda i, k: (0, 0)),           # W_lin (resident)
                pl.BlockSpec((1, Fp), lambda i, k: (0, 0)),            # b_lin (resident)
                pl.BlockSpec((2 * Fp, 4 * Fp), lambda i, k: (0, 0)),   # fused gate W
                pl.BlockSpec((1, 4 * Fp), lambda i, k: (0, 0)),        # fused gate b
            ],
            out_specs=pl.BlockSpec((TM, Fp), lambda i, k: (i, 0)),
            scratch_shapes=[
                pltpu.VMEM((TM, Fp), jnp.float32),        # aggregation accumulator
                pltpu.VMEM((TM, 2 * Fp), jnp.bfloat16),   # [h | x] staging
            ],
        ),
        compiler_params=pltpu.CompilerParams(
            dimension_semantics=("parallel", "arbitrary"),
            vmem_limit_bytes=48 << 20,
        ),
        cost_estimate=cost,
    )(a_p, x_bf_p, x_f32_p, wlin_p, blin_p, wg_p, bg_p)

    return out_p[:N, :F]


if __name__ == "__main__":
    # Small, self-consistent shapes: N nodes, F = in_feats = out_feats.
    N, F = 8, 32

    key = jax.random.PRNGKey(0)
    k_adj, k_x, k_wl, k_bl, k_wi, k_bi, k_wh, k_bh = jax.random.split(key, 8)

    # Deterministic random directed graph (dense {0,1} adjacency).
    adj = (jax.random.uniform(k_adj, (N, N)) < 0.4).astype(jnp.float32)
    features = jax.random.normal(k_x, (N, F), dtype=jnp.float32)

    # Parameter init matching the nn.Module shapes.
    s = 1.0 / jnp.sqrt(F)
    w_lin = jax.random.uniform(k_wl, (F, F), minval=-s, maxval=s)
    b_lin = jax.random.uniform(k_bl, (F,), minval=-s, maxval=s)
    w_ih = jax.random.uniform(k_wi, (3 * F, F), minval=-s, maxval=s)
    b_ih = jax.random.uniform(k_bi, (3 * F,), minval=-s, maxval=s)
    w_hh = jax.random.uniform(k_wh, (3 * F, F), minval=-s, maxval=s)
    b_hh = jax.random.uniform(k_bh, (3 * F,), minval=-s, maxval=s)

    out = gcn_layer_with_gru(adj, features, w_lin, b_lin, w_ih, b_ih, w_hh, b_hh)
    out = jax.block_until_ready(out)
    assert out.shape == (N, F)

    # Reference 1: pure f32 (PyTorch-exact math). The kernel uses bf16 matmul
    # inputs (f32 accumulation), so compare with a bf16-level tolerance.
    agg = adj @ features
    h = jnp.maximum(agg @ w_lin.T + b_lin, 0.0)
    gi = h @ w_ih.T + b_ih
    gh = features @ w_hh.T + b_hh
    r = jax.nn.sigmoid(gi[:, :F] + gh[:, :F])
    z = jax.nn.sigmoid(gi[:, F:2 * F] + gh[:, F:2 * F])
    n = jnp.tanh(gi[:, 2 * F:] + r * gh[:, 2 * F:])
    ref_f32 = (1.0 - z) * n + z * features
    assert jnp.allclose(out, ref_f32, atol=5e-2, rtol=5e-2)

    # Reference 2: same bf16 cast points as the kernel -> tight tolerance.
    bf16 = jnp.bfloat16
    aggb = jnp.dot(adj.astype(bf16), features.astype(bf16),
                   preferred_element_type=jnp.float32)
    hb = jnp.maximum(jnp.dot(aggb.astype(bf16), w_lin.T.astype(bf16),
                             preferred_element_type=jnp.float32) + b_lin, 0.0)
    gib = jnp.dot(hb.astype(bf16), w_ih.T.astype(bf16),
                  preferred_element_type=jnp.float32) + b_ih
    ghb = jnp.dot(features.astype(bf16), w_hh.T.astype(bf16),
                  preferred_element_type=jnp.float32) + b_hh
    rb = jax.nn.sigmoid(gib[:, :F] + ghb[:, :F])
    zb = jax.nn.sigmoid(gib[:, F:2 * F] + ghb[:, F:2 * F])
    nb = jnp.tanh(gib[:, 2 * F:] + rb * ghb[:, 2 * F:])
    ref_bf16 = (1.0 - zb) * nb + zb * features
    assert jnp.allclose(out, ref_bf16, atol=1e-4, rtol=1e-4)

    print("KERNEL_OK")
</pallas_src>

<mosaic_0001>
module attributes {stable_mosaic.version = 11 : i64} {
  func.func @gcn_gru_kernel(%arg0: i32, %arg1: i32, %arg2: memref<128x128xbf16, #tpu.memory_space<vmem>>, %arg3: memref<128x128xbf16, #tpu.memory_space<vmem>>, %arg4: memref<128x128xf32, #tpu.memory_space<vmem>>, %arg5: memref<128x128xbf16, #tpu.memory_space<vmem>>, %arg6: memref<1x128xf32, #tpu.memory_space<vmem>>, %arg7: memref<256x512xbf16, #tpu.memory_space<vmem>>, %arg8: memref<1x512xf32, #tpu.memory_space<vmem>>, %arg9: memref<128x128xf32, #tpu.memory_space<vmem>>, %arg10: memref<128x128xf32, #tpu.memory_space<vmem>>, %arg11: memref<128x256xbf16, #tpu.memory_space<vmem>>) attributes {dimension_semantics = [#tpu.dimension_semantics<parallel>, #tpu.dimension_semantics<arbitrary>], iteration_bounds = array<i64: 1, 1>, scalar_prefetch = 0 : i64, scratch_operands = 2 : i64, tpu.core_type = #tpu.core_type<tc>, window_params = [{transform_indices = @transform_0, window_bounds = array<i64: 128, 128>}, {transform_indices = @transform_1, window_bounds = array<i64: 128, 128>}, {transform_indices = @transform_2, window_bounds = array<i64: 128, 128>}, {pipeline_mode = #tpu.pipeline_mode<synchronous>, transform_indices = @transform_3, window_bounds = array<i64: 128, 128>}, {pipeline_mode = #tpu.pipeline_mode<synchronous>, transform_indices = @transform_4, window_bounds = array<i64: 1, 128>}, {pipeline_mode = #tpu.pipeline_mode<synchronous>, transform_indices = @transform_5, window_bounds = array<i64: 256, 512>}, {pipeline_mode = #tpu.pipeline_mode<synchronous>, transform_indices = @transform_6, window_bounds = array<i64: 1, 512>}, {transform_indices = @transform_7, window_bounds = array<i64: 128, 128>}]} {
    %c0_i32 = arith.constant 0 : i32
    %0 = arith.cmpi eq, %arg1, %c0_i32 : i32
    %1 = arith.extui %0 : i1 to i32
    %c0_i32_0 = arith.constant 0 : i32
    %2 = arith.cmpi ne, %1, %c0_i32_0 : i32
    scf.if %2 {
      %cst_10 = arith.constant 0.000000e+00 : f32
      %12 = vector.broadcast %cst_10 : f32 to vector<128x128xf32>
      %c0_11 = arith.constant 0 : index
      %c0_12 = arith.constant 0 : index
      %13 = vector.load %arg10[%c0_11, %c0_12] : memref<128x128xf32, #tpu.memory_space<vmem>>, vector<128x128xf32>
      tpu.vector_store %arg10[%c0_11, %c0_12], %12 {strides = array<i32>} : memref<128x128xf32, #tpu.memory_space<vmem>>, vector<128x128xf32>,
    } else {
    }
    %c0 = arith.constant 0 : index
    %c0_1 = arith.constant 0 : index
    %3 = vector.load %arg10[%c0, %c0_1] : memref<128x128xf32, #tpu.memory_space<vmem>>, vector<128x128xf32>
    %c0_2 = arith.constant 0 : index
    %c0_3 = arith.constant 0 : index
    %4 = vector.load %arg2[%c0_2, %c0_3] : memref<128x128xbf16, #tpu.memory_space<vmem>>, vector<128x128xbf16>
    %c0_4 = arith.constant 0 : index
    %c0_5 = arith.constant 0 : index
    %5 = vector.load %arg3[%c0_4, %c0_5] : memref<128x128xbf16, #tpu.memory_space<vmem>>, vector<128x128xbf16>
    %cst = arith.constant dense<0.000000e+00> : vector<128x128xf32>
    %6 = tpu.matmul %4, %5, %cst {dimension_numbers = #tpu.dot_dimension_numbers<[1], [0], [0], [1], [0, 0, 1, 1], [], []>} : vector<128x128xbf16>, vector<128x128xbf16>, vector<128x128xf32> -> vector<128x128xf32>
    %7 = arith.addf %3, %6 : vector<128x128xf32>
    %c0_6 = arith.constant 0 : index
    %c0_7 = arith.constant 0 : index
    %8 = vector.load %arg10[%c0_6, %c0_7] : memref<128x128xf32, #tpu.memory_space<vmem>>, vector<128x128xf32>
    tpu.vector_store %arg10[%c0_6, %c0_7], %7 {strides = array<i32>} : memref<128x128xf32, #tpu.memory_space<vmem>>, vector<128x128xf32>,
    %c0_i32_8 = arith.constant 0 : i32
    %9 = arith.cmpi eq, %arg1, %c0_i32_8 : i32
    %10 = arith.extui %9 : i1 to i32
    %c0_i32_9 = arith.constant 0 : i32
    %11 = arith.cmpi ne, %10, %c0_i32_9 : i32
    scf.if %11 {
      %c0_10 = arith.constant 0 : index
      %c0_11 = arith.constant 0 : index
      %12 = vector.load %arg4[%c0_10, %c0_11] : memref<128x128xf32, #tpu.memory_space<vmem>>, vector<128x128xf32>
      %c0_12 = arith.constant 0 : index
      %c0_13 = arith.constant 0 : index
      %13 = vector.load %arg10[%c0_12, %c0_13] : memref<128x128xf32, #tpu.memory_space<vmem>>, vector<128x128xf32>
      %14 = arith.truncf %13 : vector<128x128xf32> to vector<128x128xbf16>
      %c0_14 = arith.constant 0 : index
      %c0_15 = arith.constant 0 : index
      %15 = vector.load %arg5[%c0_14, %c0_15] : memref<128x128xbf16, #tpu.memory_space<vmem>>, vector<128x128xbf16>
      %cst_16 = arith.constant dense<0.000000e+00> : vector<128x128xf32>
      %16 = tpu.matmul %14, %15, %cst_16 {dimension_numbers = #tpu.dot_dimension_numbers<[1], [0], [0], [1], [0, 0, 1, 1], [], []>} : vector<128x128xbf16>, vector<128x128xbf16>, vector<128x128xf32> -> vector<128x128xf32>
      %c0_17 = arith.constant 0 : index
      %c0_18 = arith.constant 0 : index
      %17 = vector.load %arg6[%c0_17, %c0_18] : memref<1x128xf32, #tpu.memory_space<vmem>>, vector<1x128xf32>
      %18 = vector.broadcast %17 : vector<1x128xf32> to vector<128x128xf32>
      %19 = arith.addf %16, %18 : vector<128x128xf32>
      %cst_19 = arith.constant 0.000000e+00 : f32
      %20 = vector.broadcast %cst_19 : f32 to vector<128x128xf32>
      %21 = arith.maximumf %19, %20 : vector<128x128xf32>
      %22 = arith.truncf %21 : vector<128x128xf32> to vector<128x128xbf16>
      %c0_20 = arith.constant 0 : index
      %c0_21 = arith.constant 0 : index
      %23 = vector.load %arg11[%c0_20, %c0_21] : memref<128x256xbf16, #tpu.memory_space<vmem>>, vector<128x128xbf16>
      tpu.vector_store %arg11[%c0_20, %c0_21], %22 {strides = array<i32>} : memref<128x256xbf16, #tpu.memory_space<vmem>>, vector<128x128xbf16>,
      %24 = arith.truncf %12 : vector<128x128xf32> to vector<128x128xbf16>
      %c0_22 = arith.constant 0 : index
      %c128 = arith.constant 128 : index
      %25 = vector.load %arg11[%c0_22, %c128] : memref<128x256xbf16, #tpu.memory_space<vmem>>, vector<128x128xbf16>
      tpu.vector_store %arg11[%c0_22, %c128], %24 {strides = array<i32>} : memref<128x256xbf16, #tpu.memory_space<vmem>>, vector<128x128xbf16>,
      %c0_23 = arith.constant 0 : index
      %c0_24 = arith.constant 0 : index
      %26 = vector.load %arg11[%c0_23, %c0_24] : memref<128x256xbf16, #tpu.memory_space<vmem>>, vector<128x256xbf16>
      %c0_25 = arith.constant 0 : index
      %c0_26 = arith.constant 0 : index
      %27 = vector.load %arg7[%c0_25, %c0_26] : memref<256x512xbf16, #tpu.memory_space<vmem>>, vector<256x512xbf16>
      %cst_27 = arith.constant dense<0.000000e+00> : vector<128x512xf32>
      %28 = tpu.matmul %26, %27, %cst_27 {dimension_numbers = #tpu.dot_dimension_numbers<[1], [0], [0], [1], [0, 0, 1, 1], [], []>} : vector<128x256xbf16>, vector<256x512xbf16>, vector<128x512xf32> -> vector<128x512xf32>
      %c0_28 = arith.constant 0 : index
      %c0_29 = arith.constant 0 : index
      %29 = vector.load %arg8[%c0_28, %c0_29] : memref<1x512xf32, #tpu.memory_space<vmem>>, vector<1x512xf32>
      %30 = vector.broadcast %29 : vector<1x512xf32> to vector<128x512xf32>
      %31 = arith.addf %28, %30 : vector<128x512xf32>
      %32 = vector.extract_strided_slice %31 {offsets = [0, 0], sizes = [128, 128], strides = [1, 1]} : vector<128x512xf32> to vector<128x128xf32>
      %33 = arith.negf %32 : vector<128x128xf32>
      %34 = math.exp %33 : vector<128x128xf32>
      %cst_30 = arith.constant 1.000000e+00 : f32
      %35 = vector.broadcast %cst_30 : f32 to vector<128x128xf32>
      %36 = arith.addf %35, %34 : vector<128x128xf32>
      %37 = arith.divf %35, %36 : vector<128x128xf32>
      %38 = vector.extract_strided_slice %31 {offsets = [0, 128], sizes = [128, 128], strides = [1, 1]} : vector<128x512xf32> to vector<128x128xf32>
      %39 = arith.negf %38 : vector<128x128xf32>
      %40 = math.exp %39 : vector<128x128xf32>
      %cst_31 = arith.constant 1.000000e+00 : f32
      %41 = vector.broadcast %cst_31 : f32 to vector<128x128xf32>
      %42 = arith.addf %41, %40 : vector<128x128xf32>
      %43 = arith.divf %41, %42 : vector<128x128xf32>
      %44 = vector.extract_strided_slice %31 {offsets = [0, 256], sizes = [128, 128], strides = [1, 1]} : vector<128x512xf32> to vector<128x128xf32>
      %45 = vector.extract_strided_slice %31 {offsets = [0, 384], sizes = [128, 128], strides = [1, 1]} : vector<128x512xf32> to vector<128x128xf32>
      %46 = arith.mulf %37, %45 : vector<128x128xf32>
      %47 = arith.addf %44, %46 : vector<128x128xf32>
      %48 = math.tanh %47 : vector<128x128xf32>
      %cst_32 = arith.constant 1.000000e+00 : f32
      %49 = vector.broadcast %cst_32 : f32 to vector<128x128xf32>
      %50 = arith.subf %49, %43 : vector<128x128xf32>
      %51 = arith.mulf %50, %48 : vector<128x128xf32>
      %52 = arith.mulf %43, %12 : vector<128x128xf32>
      %53 = arith.addf %51, %52 : vector<128x128xf32>
      %c0_33 = arith.constant 0 : index
      %c0_34 = arith.constant 0 : index
      %54 = vector.load %arg9[%c0_33, %c0_34] : memref<128x128xf32, #tpu.memory_space<vmem>>, vector<128x128xf32>
      tpu.vector_store %arg9[%c0_33, %c0_34], %53 {strides = array<i32>} : memref<128x128xf32, #tpu.memory_space<vmem>>, vector<128x128xf32>,
    } else {
    }
    return
  }
  func.func @transform_0(%arg0: i32, %arg1: i32) -> (i32, i32) {
    %c0_i32 = arith.constant 0 : i32
    return %arg0, %arg1 : i32, i32
  }
  func.func @transform_1(%arg0: i32, %arg1: i32) -> (i32, i32) {
    %c0_i32 = arith.constant 0 : i32
    %c0_i32_0 = arith.constant 0 : i32
    return %arg1, %c0_i32 : i32, i32
  }
  func.func @transform_2(%arg0: i32, %arg1: i32) -> (i32, i32) {
    %c0_i32 = arith.constant 0 : i32
    %c0_i32_0 = arith.constant 0 : i32
    return %arg0, %c0_i32 : i32, i32
  }
  func.func @transform_3(%arg0: i32, %arg1: i32) -> (i32, i32) {
    %c0_i32 = arith.constant 0 : i32
    %c0_i32_0 = arith.constant 0 : i32
    %c0_i32_1 = arith.constant 0 : i32
    return %c0_i32, %c0_i32_0 : i32, i32
  }
  func.func @transform_4(%arg0: i32, %arg1: i32) -> (i32, i32) {
    %c0_i32 = arith.constant 0 : i32
    %c0_i32_0 = arith.constant 0 : i32
    %c0_i32_1 = arith.constant 0 : i32
    return %c0_i32, %c0_i32_0 : i32, i32
  }
  func.func @transform_5(%arg0: i32, %arg1: i32) -> (i32, i32) {
    %c0_i32 = arith.constant 0 : i32
    %c0_i32_0 = arith.constant 0 : i32
    %c0_i32_1 = arith.constant 0 : i32
    return %c0_i32, %c0_i32_0 : i32, i32
  }
  func.func @transform_6(%arg0: i32, %arg1: i32) -> (i32, i32) {
    %c0_i32 = arith.constant 0 : i32
    %c0_i32_0 = arith.constant 0 : i32
    %c0_i32_1 = arith.constant 0 : i32
    return %c0_i32, %c0_i32_0 : i32, i32
  }
  func.func @transform_7(%arg0: i32, %arg1: i32) -> (i32, i32) {
    %c0_i32 = arith.constant 0 : i32
    %c0_i32_0 = arith.constant 0 : i32
    return %arg0, %c0_i32 : i32, i32
  }
}

</mosaic_0001>

<llo_original>
// kernel: tpu_custom_call.1
$region0: #{tpu_custom_call.1}
  #allocation0 [shape = 'u32[]', space=smem, size = 0x4, offset = 0x4, fixed_abs, tag = 'smem constant byte address 0x4 - core index']
  #allocation1 [shape = 'u32[144,128]{1,0:T(1,128)}', space=vmem, size = 0x12000, scoped, tag = 'internal scratch']
  #allocation2 [shape = 'f32[128,128]{1,0:T(8,128)}', space=vmem, size = 0x10000, scoped, tag = 'scratch operand']
  #allocation3 [shape = 'bf16[128,256]{1,0:T(8,128)(2,1)}', space=vmem, size = 0x10000, scoped, tag = 'scratch operand']
  %s0 = inlined_call_operand.hbm [shape: bf16[128,128], index: 0, kind: input, shape index: {}]
  %s1 = inlined_call_operand.hbm [shape: bf16[128,128], index: 1, kind: input, shape index: {}]
  %s2 = inlined_call_operand.hbm [shape: f32[128,128], index: 2, kind: input, shape index: {}]
  %s3 = inlined_call_operand.hbm [shape: bf16[128,128], index: 3, kind: input, shape index: {}]
  %s4 = inlined_call_operand.vmem [shape: f32[1,128], index: 4, kind: input, shape index: {}]
  %s5 = inlined_call_operand.hbm [shape: bf16[256,512], index: 5, kind: input, shape index: {}]
  %s6 = inlined_call_operand.vmem [shape: f32[1,512], index: 6, kind: input, shape index: {}]
  %s7 = inlined_call_operand.hbm [shape: f32[128,128], index: 7, kind: output, shape index: {}]
  %s8 = sld [smem:[#allocation0]]
  $region66: #{tpu_custom_call.1} parent=0
    _
  %s10 = ssub.s32 1, %s8
  %s11 = scalar_select 0, %s10, %s8
  $region1: #{tpu_custom_call.1} parent=0
    #allocation4 [shape = 'u8[32768]{0}', space=vmem, size = 0x8000, scoped, tag = 'input window, operand 0, single buffered']
    #allocation5 [shape = 's32[1]{0}', space=sflag, size = 0x4, scoped, tag = 'scoped memory for tpu_custom_call.1']
    #allocation6 [shape = 's32[1]{0}', space=sflag, size = 0x4, scoped, tag = 'scoped memory for tpu_custom_call.1']
    #allocation7 [shape = 'u8[32768]{0}', space=vmem, size = 0x8000, scoped, tag = 'input window, operand 1, single buffered']
    #allocation8 [shape = 's32[1]{0}', space=sflag, size = 0x4, scoped, tag = 'scoped memory for tpu_custom_call.1']
    #allocation9 [shape = 'u8[65536]{0}', space=vmem, size = 0x10000, scoped, tag = 'input window, operand 2, single buffered']
    #allocation10 [shape = 'u8[32768]{0}', space=vmem, size = 0x8000, scoped, tag = 'input window, operand 3, single buffered']
    #allocation11 [shape = 's32[1]{0}', space=sflag, size = 0x4, scoped, tag = 'scoped memory for tpu_custom_call.1']
    #allocation12 [shape = 'u8[262144]{0}', space=vmem, size = 0x40000, scoped, tag = 'input window, operand 5, single buffered']
    #allocation13 [shape = 'u8[65536]{0}', space=vmem, size = 0x10000, scoped, tag = 'output window, operand 0, single buffered']
    %12 = vsyncpa [#allocation5], 0
    %13 = vsyncpa [#allocation8], 0
    %14 = vsyncpa [#allocation11], 0
    %15 = vsyncpa [#allocation6], 0
    // Predicated region
    $region2: #{tpu_custom_call.1} parent=1 // pred_check
      _
    $region3: #{tpu_custom_call.1} parent=1 // pred_check_branch
      %17 = sbr.rel (0) target = $region5
    $region4: #{tpu_custom_call.1} parent=1 // pred_region
      %s19 = ssub.s32 1024, 1024
      %20 = vsyncadd [#allocation5], %s19
      %s21 = sshll.u32 [#allocation4], 4
      %s22 = int_to_ptr.vmem [resolvable:$true] %s21
      %27 = dma.hbm_to_vmem [thread:$0]  %s0, 1024, %s22, [#allocation5], 64, 64, 4
    $region5: #{tpu_custom_call.1} parent=1 // pred_fallthru
      _
    // Predicated region
    $region6: #{tpu_custom_call.1} parent=1 // pred_check
      _
    $region7: #{tpu_custom_call.1} parent=1 // pred_check_branch
      %29 = sbr.rel (0) target = $region9
    $region8: #{tpu_custom_call.1} parent=1 // pred_region
      %s31 = ssub.s32 1024, 1024
      %32 = vsyncadd [#allocation8], %s31
      %s33 = sshll.u32 [#allocation7], 4
      %s34 = int_to_ptr.vmem [resolvable:$true] %s33
      %39 = dma.hbm_to_vmem [thread:$0]  %s1, 1024, %s34, [#allocation8], 64, 64, 4
    $region9: #{tpu_custom_call.1} parent=1 // pred_fallthru
      _
    // Predicated region
    $region10: #{tpu_custom_call.1} parent=1 // pred_check
      _
    $region11: #{tpu_custom_call.1} parent=1 // pred_check_branch
      %41 = sbr.rel (0) target = $region13
    $region12: #{tpu_custom_call.1} parent=1 // pred_region
      %s43 = ssub.s32 2048, 2048
      %44 = vsyncadd [#allocation8], %s43
      %s45 = sshll.u32 [#allocation9], 4
      %s46 = int_to_ptr.vmem [resolvable:$true] %s45
      %51 = dma.hbm_to_vmem [thread:$0]  %s2, 2048, %s46, [#allocation8], 128, 128, 8
    $region13: #{tpu_custom_call.1} parent=1 // pred_fallthru
      _
    // Predicated region
    $region14: #{tpu_custom_call.1} parent=1 // pred_check
      _
    $region15: #{tpu_custom_call.1} parent=1 // pred_check_branch
      %53 = sbr.rel (0) target = $region17
    $region16: #{tpu_custom_call.1} parent=1 // pred_region
      %s55 = ssub.s32 1024, 1024
      %56 = vsyncadd [#allocation11], %s55
      %s57 = sshll.u32 [#allocation10], 4
      %s58 = int_to_ptr.vmem [resolvable:$true] %s57
      %63 = dma.hbm_to_vmem [thread:$0]  %s3, 1024, %s58, [#allocation11], 64, 64, 4
    $region17: #{tpu_custom_call.1} parent=1 // pred_fallthru
      _
    // Predicated region
    $region18: #{tpu_custom_call.1} parent=1 // pred_check
      _
    $region19: #{tpu_custom_call.1} parent=1 // pred_check_branch
      %65 = sbr.rel (0) target = $region21
    $region20: #{tpu_custom_call.1} parent=1 // pred_region
      _
    $region21: #{tpu_custom_call.1} parent=1 // pred_fallthru
      _
    // Predicated region
    $region22: #{tpu_custom_call.1} parent=1 // pred_check
      _
    $region23: #{tpu_custom_call.1} parent=1 // pred_check_branch
      %67 = sbr.rel (0) target = $region25
    $region24: #{tpu_custom_call.1} parent=1 // pred_region
      %s69 = ssub.s32 8192, 8192
      %70 = vsyncadd [#allocation11], %s69
      %s71 = sshll.u32 [#allocation12], 4
      %s72 = int_to_ptr.vmem [resolvable:$true] %s71
      %77 = dma.hbm_to_vmem [thread:$0]  %s5, 8192, %s72, [#allocation11], 256, 256, 16
    $region25: #{tpu_custom_call.1} parent=1 // pred_fallthru
      _
    // Predicated region
    $region26: #{tpu_custom_call.1} parent=1 // pred_check
      _
    $region27: #{tpu_custom_call.1} parent=1 // pred_check_branch
      %79 = sbr.rel (0) target = $region29
    $region28: #{tpu_custom_call.1} parent=1 // pred_region
      _
    $region29: #{tpu_custom_call.1} parent=1 // pred_fallthru
      _
    // Predicated region
    $region30: #{tpu_custom_call.1} parent=1 // pred_check
      _
    $region31: #{tpu_custom_call.1} parent=1 // pred_check_branch
      %81 = sbr.rel (0) target = $region33
    $region32: #{tpu_custom_call.1} parent=1 // pred_region
      %82 = dma.done [#allocation5], 1024
    $region33: #{tpu_custom_call.1} parent=1 // pred_fallthru
      _
    // Predicated region
    $region34: #{tpu_custom_call.1} parent=1 // pred_check
      _
    $region35: #{tpu_custom_call.1} parent=1 // pred_check_branch
      %84 = sbr.rel (0) target = $region37
    $region36: #{tpu_custom_call.1} parent=1 // pred_region
      %85 = dma.done [#allocation8], 1024
    $region37: #{tpu_custom_call.1} parent=1 // pred_fallthru
      _
    // Predicated region
    $region38: #{tpu_custom_call.1} parent=1 // pred_check
      _
    $region39: #{tpu_custom_call.1} parent=1 // pred_check_branch
      %87 = sbr.rel (0) target = $region41
    $region40: #{tpu_custom_call.1} parent=1 // pred_region
      %88 = dma.done [#allocation8], 2048
    $region41: #{tpu_custom_call.1} parent=1 // pred_fallthru
      _
    // Predicated region
    $region42: #{tpu_custom_call.1} parent=1 // pred_check
      _
    $region43: #{tpu_custom_call.1} parent=1 // pred_check_branch
      %90 = sbr.rel (0) target = $region45
    $region44: #{tpu_custom_call.1} parent=1 // pred_region
      %91 = dma.done [#allocation11], 1024
    $region45: #{tpu_custom_call.1} parent=1 // pred_fallthru
      _
    // Predicated region
    $region46: #{tpu_custom_call.1} parent=1 // pred_check
      _
    $region47: #{tpu_custom_call.1} parent=1 // pred_check_branch
      %93 = sbr.rel (0) target = $region49
    $region48: #{tpu_custom_call.1} parent=1 // pred_region
      %94 = dma.done [#allocation11], 8192
    $region49: #{tpu_custom_call.1} parent=1 // pred_fallthru
      _
    %p96 = scmp.eq.s32.totalorder 0, 0
    // Predicated region
    $region50: #{tpu_custom_call.1} parent=1 // pred_check
      %p97 = pneg %p96
    $region51: #{tpu_custom_call.1} parent=1 // pred_check_branch
      %99 = sbr.rel (%p97) target = $region53
    $region52: #{tpu_custom_call.1} parent=1 // pred_region
      %100 = vst [vmem:[#allocation2] sm:$0xff] 0.0
      %101 = vst [vmem:[#allocation2 + $0x8] sm:$0xff] 0.0
      %102 = vst [vmem:[#allocation2 + $0x10] sm:$0xff] 0.0
      %103 = vst [vmem:[#allocation2 + $0x18] sm:$0xff] 0.0
      %104 = vst [vmem:[#allocation2 + $0x20] sm:$0xff] 0.0
      %105 = vst [vmem:[#allocation2 + $0x28] sm:$0xff] 0.0
      %106 = vst [vmem:[#allocation2 + $0x30] sm:$0xff] 0.0
      %107 = vst [vmem:[#allocation2 + $0x38] sm:$0xff] 0.0
      %108 = vst [vmem:[#allocation2 + $0x40] sm:$0xff] 0.0
      %109 = vst [vmem:[#allocation2 + $0x48] sm:$0xff] 0.0
      %110 = vst [vmem:[#allocation2 + $0x50] sm:$0xff] 0.0
      %111 = vst [vmem:[#allocation2 + $0x58] sm:$0xff] 0.0
      %112 = vst [vmem:[#allocation2 + $0x60] sm:$0xff] 0.0
      %113 = vst [vmem:[#allocation2 + $0x68] sm:$0xff] 0.0
      %114 = vst [vmem:[#allocation2 + $0x70] sm:$0xff] 0.0
      %115 = vst [vmem:[#allocation2 + $0x78] sm:$0xff] 0.0
    $region53: #{tpu_custom_call.1} parent=1 // pred_fallthru
      _
    %v116 = vld [vmem:[#allocation2] sm:$0xff]
    %v117 = vld [vmem:[#allocation2 + $0x8] sm:$0xff]
    %v118 = vld [vmem:[#allocation2 + $0x10] sm:$0xff]
    %v119 = vld [vmem:[#allocation2 + $0x18] sm:$0xff]
    %v120 = vld [vmem:[#allocation2 + $0x20] sm:$0xff]
    %v121 = vld [vmem:[#allocation2 + $0x28] sm:$0xff]
    %v122 = vld [vmem:[#allocation2 + $0x30] sm:$0xff]
    %v123 = vld [vmem:[#allocation2 + $0x38] sm:$0xff]
    %v124 = vld [vmem:[#allocation2 + $0x40] sm:$0xff]
    %v125 = vld [vmem:[#allocation2 + $0x48] sm:$0xff]
    %v126 = vld [vmem:[#allocation2 + $0x50] sm:$0xff]
    %v127 = vld [vmem:[#allocation2 + $0x58] sm:$0xff]
    %v128 = vld [vmem:[#allocation2 + $0x60] sm:$0xff]
    %v129 = vld [vmem:[#allocation2 + $0x68] sm:$0xff]
    %v130 = vld [vmem:[#allocation2 + $0x70] sm:$0xff]
    %v131 = vld [vmem:[#allocation2 + $0x78] sm:$0xff]
    %v132 = vld [vmem:[#allocation4] sm:$0xf]
    %v133 = vld [vmem:[#allocation4 + $0x4] sm:$0xf]
    %v134 = vld [vmem:[#allocation4 + $0x8] sm:$0xf]
    %v135 = vld [vmem:[#allocation4 + $0xc] sm:$0xf]
    %v136 = vld [vmem:[#allocation4 + $0x10] sm:$0xf]
    %v137 = vld [vmem:[#allocation4 + $0x14] sm:$0xf]
    %v138 = vld [vmem:[#allocation4 + $0x18] sm:$0xf]
    %v139 = vld [vmem:[#allocation4 + $0x1c] sm:$0xf]
    %v140 = vld [vmem:[#allocation4 + $0x20] sm:$0xf]
    %v141 = vld [vmem:[#allocation4 + $0x24] sm:$0xf]
    %v142 = vld [vmem:[#allocation4 + $0x28] sm:$0xf]
    %v143 = vld [vmem:[#allocation4 + $0x2c] sm:$0xf]
    %v144 = vld [vmem:[#allocation4 + $0x30] sm:$0xf]
    %v145 = vld [vmem:[#allocation4 + $0x34] sm:$0xf]
    %v146 = vld [vmem:[#allocation4 + $0x38] sm:$0xf]
    %v147 = vld [vmem:[#allocation4 + $0x3c] sm:$0xf]
    %v148 = vld [vmem:[#allocation7] sm:$0xf]
    %v149 = vld [vmem:[#allocation7 + $0x4] sm:$0xf]
    %v150 = vld [vmem:[#allocation7 + $0x8] sm:$0xf]
    %v151 = vld [vmem:[#allocation7 + $0xc] sm:$0xf]
    %v152 = vld [vmem:[#allocation7 + $0x10] sm:$0xf]
    %v153 = vld [vmem:[#allocation7 + $0x14] sm:$0xf]
    %v154 = vld [vmem:[#allocation7 + $0x18] sm:$0xf]
    %v155 = vld [vmem:[#allocation7 + $0x1c] sm:$0xf]
    %v156 = vld [vmem:[#allocation7 + $0x20] sm:$0xf]
    %v157 = vld [vmem:[#allocation7 + $0x24] sm:$0xf]
    %v158 = vld [vmem:[#allocation7 + $0x28] sm:$0xf]
    %v159 = vld [vmem:[#allocation7 + $0x2c] sm:$0xf]
    %v160 = vld [vmem:[#allocation7 + $0x30] sm:$0xf]
    %v161 = vld [vmem:[#allocation7 + $0x34] sm:$0xf]
    %v162 = vld [vmem:[#allocation7 + $0x38] sm:$0xf]
    %v163 = vld [vmem:[#allocation7 + $0x3c] sm:$0xf]
    %v180 = vunpack.c.l.b16 %v132
    %v181 = vunpack.c.l.b16 %v133
    %v182 = vunpack.c.l.b16 %v134
    %v183 = vunpack.c.l.b16 %v135
    %v184 = vunpack.c.l.b16 %v136
    %v185 = vunpack.c.l.b16 %v137
    %v186 = vunpack.c.l.b16 %v138
    %v187 = vunpack.c.l.b16 %v139
    %v188 = vunpack.c.l.b16 %v140
    %v189 = vunpack.c.l.b16 %v141
    %v190 = vunpack.c.l.b16 %v142
    %v191 = vunpack.c.l.b16 %v143
    %v192 = vunpack.c.l.b16 %v144
    %v193 = vunpack.c.l.b16 %v145
    %v194 = vunpack.c.l.b16 %v146
    %v195 = vunpack.c.l.b16 %v147
    %v196 = vpack.c.b16 %v181, %v180
    %v197 = vpack.c.b16 %v183, %v182
    %v198 = vpack.c.b16 %v185, %v184
    %v199 = vpack.c.b16 %v187, %v186
    %v200 = vpack.c.b16 %v189, %v188
    %v201 = vpack.c.b16 %v191, %v190
    %v202 = vpack.c.b16 %v193, %v192
    %v203 = vpack.c.b16 %v195, %v194
    %v228 = vunpack.c.l.b16 %v148
    %v229 = vunpack.c.l.b16 %v149
    %v230 = vunpack.c.l.b16 %v150
    %v231 = vunpack.c.l.b16 %v151
    %v232 = vunpack.c.l.b16 %v152
    %v233 = vunpack.c.l.b16 %v153
    %v234 = vunpack.c.l.b16 %v154
    %v235 = vunpack.c.l.b16 %v155
    %v236 = vunpack.c.l.b16 %v156
    %v237 = vunpack.c.l.b16 %v157
    %v238 = vunpack.c.l.b16 %v158
    %v239 = vunpack.c.l.b16 %v159
    %v240 = vunpack.c.l.b16 %v160
    %v241 = vunpack.c.l.b16 %v161
    %v242 = vunpack.c.l.b16 %v162
    %v243 = vunpack.c.l.b16 %v163
    %v244 = vpack.c.b16 %v229, %v228
    %v245 = vpack.c.b16 %v231, %v230
    %v246 = vpack.c.b16 %v233, %v232
    %v247 = vpack.c.b16 %v235, %v234
    %v248 = vpack.c.b16 %v237, %v236
    %v249 = vpack.c.b16 %v239, %v238
    %v250 = vpack.c.b16 %v241, %v240
    %v251 = vpack.c.b16 %v243, %v242
    %260 = vmatprep.subr.bf16.mxu0 0
    %261 = vmatpush1.bf16.msra.mxu0 %v251
    %262 = vmatprep.subr.bf16.mxu0 0
    %263 = vmatpush1.bf16.msra.mxu0 %v250
    %264 = vmatprep.subr.bf16.mxu0 0
    %265 = vmatpush1.bf16.msra.mxu0 %v249
    %266 = vmatprep.subr.bf16.mxu0 0
    %267 = vmatpush1.bf16.msra.mxu0 %v248
    %268 = vmatprep.subr.bf16.mxu0 0
    %269 = vmatpush1.bf16.msra.mxu0 %v247
    %270 = vmatprep.subr.bf16.mxu0 0
    %271 = vmatpush1.bf16.msra.mxu0 %v246
    %272 = vmatprep.subr.bf16.mxu0 0
    %273 = vmatpush1.bf16.msra.mxu0 %v245
    %274 = vmatprep.subr.bf16.mxu0 0
    %275 = vmatpush1.bf16.msra.mxu0 %v244
    %276 = vmatprep.subr.bf16.mxu0 0
    %277 = vmatpush2.bf16.msra.mxu0 0
    %278 = vmatprep.subr.bf16.mxu0 0
    %279 = vmatpush2.bf16.msra.mxu0 0
    %280 = vmatprep.subr.bf16.mxu0 0
    %281 = vmatpush2.bf16.msra.mxu0 0
    %282 = vmatprep.subr.bf16.mxu0 0
    %283 = vmatpush2.bf16.msra.mxu0 0
    %284 = vmatprep.subr.bf16.mxu0 0
    %285 = vmatpush2.bf16.msra.mxu0 0
    %286 = vmatprep.subr.bf16.mxu0 0
    %287 = vmatpush2.bf16.msra.mxu0 0
    %288 = vmatprep.subr.bf16.mxu0 0
    %289 = vmatpush2.bf16.msra.mxu0 0
    %290 = vmatprep.subr.bf16.mxu0 0
    %291 = vmatpush2.bf16.msra.mxu0 0
    %292 = vmatprep.mubr.bf16.mxu0 0
    %293 = vmatmul.mubr.bf16.gmra.mxu0 %v196
    %v294 = vpop.f32.mrf.mxu0
    %v295 = vadd.f32 0.0, %v294
    %v296 = vpop.f32.mrf.mxu0
    %v297 = vpop.f32.mrf.mxu0
    %v298 = vadd.f32 0.0, %v297
    %v299 = vpop.f32.mrf.mxu0
    %300 = vmatprep.mubr.bf16.mxu0 0
    %301 = vmatmul.mubr.bf16.gmra.mxu0 %v197
    %v302 = vpop.f32.mrf.mxu0
    %v303 = vadd.f32 0.0, %v302
    %v304 = vpop.f32.mrf.mxu0
    %v305 = vpop.f32.mrf.mxu0
    %v306 = vadd.f32 0.0, %v305
    %v307 = vpop.f32.mrf.mxu0
    %308 = vmatprep.mubr.bf16.mxu0 0
    %309 = vmatmul.mubr.bf16.gmra.mxu0 %v198
    %v310 = vpop.f32.mrf.mxu0
    %v311 = vadd.f32 0.0, %v310
    %v312 = vpop.f32.mrf.mxu0
    %v313 = vpop.f32.mrf.mxu0
    %v314 = vadd.f32 0.0, %v313
    %v315 = vpop.f32.mrf.mxu0
    %316 = vmatprep.mubr.bf16.mxu0 0
    %317 = vmatmul.mubr.bf16.gmra.mxu0 %v199
    %v318 = vpop.f32.mrf.mxu0
    %v319 = vadd.f32 0.0, %v318
    %v320 = vpop.f32.mrf.mxu0
    %v321 = vpop.f32.mrf.mxu0
    %v322 = vadd.f32 0.0, %v321
    %v323 = vpop.f32.mrf.mxu0
    %324 = vmatprep.mubr.bf16.mxu0 0
    %325 = vmatmul.mubr.bf16.gmra.mxu0 %v200
    %v326 = vpop.f32.mrf.mxu0
    %v327 = vadd.f32 0.0, %v326
    %v328 = vpop.f32.mrf.mxu0
    %v329 = vpop.f32.mrf.mxu0
    %v330 = vadd.f32 0.0, %v329
    %v331 = vpop.f32.mrf.mxu0
    %332 = vmatprep.mubr.bf16.mxu0 0
    %333 = vmatmul.mubr.bf16.gmra.mxu0 %v201
    %v334 = vpop.f32.mrf.mxu0
    %v335 = vadd.f32 0.0, %v334
    %v336 = vpop.f32.mrf.mxu0
    %v337 = vpop.f32.mrf.mxu0
    %v338 = vadd.f32 0.0, %v337
    %v339 = vpop.f32.mrf.mxu0
    %340 = vmatprep.mubr.bf16.mxu0 0
    %341 = vmatmul.mubr.bf16.gmra.mxu0 %v202
    %v342 = vpop.f32.mrf.mxu0
    %v343 = vadd.f32 0.0, %v342
    %v344 = vpop.f32.mrf.mxu0
    %v345 = vpop.f32.mrf.mxu0
    %v346 = vadd.f32 0.0, %v345
    %v347 = vpop.f32.mrf.mxu0
    %348 = vmatprep.mubr.bf16.mxu0 0
    %349 = vmatmul.mubr.bf16.gmra.mxu0 %v203
    %v350 = vpop.f32.mrf.mxu0
    %v351 = vadd.f32 0.0, %v350
    %v352 = vpop.f32.mrf.mxu0
    %v353 = vpop.f32.mrf.mxu0
    %v354 = vadd.f32 0.0, %v353
    %v355 = vpop.f32.mrf.mxu0
    %356 = vdwg.mxu0
    %v357 = vadd.f32 %v116, %v295
    %v358 = vadd.f32 %v117, %v298
    %v359 = vadd.f32 %v118, %v303
    %v360 = vadd.f32 %v119, %v306
    %v361 = vadd.f32 %v120, %v311
    %v362 = vadd.f32 %v121, %v314
    %v363 = vadd.f32 %v122, %v319
    %v364 = vadd.f32 %v123, %v322
    %v365 = vadd.f32 %v124, %v327
    %v366 = vadd.f32 %v125, %v330
    %v367 = vadd.f32 %v126, %v335
    %v368 = vadd.f32 %v127, %v338
    %v369 = vadd.f32 %v128, %v343
    %v370 = vadd.f32 %v129, %v346
    %v371 = vadd.f32 %v130, %v351
    %v372 = vadd.f32 %v131, %v354
    %373 = vst [vmem:[#allocation2] sm:$0xff] %v357
    %374 = vst [vmem:[#allocation2 + $0x8] sm:$0xff] %v358
    %375 = vst [vmem:[#allocation2 + $0x10] sm:$0xff] %v359
    %376 = vst [vmem:[#allocation2 + $0x18] sm:$0xff] %v360
    %377 = vst [vmem:[#allocation2 + $0x20] sm:$0xff] %v361
    %378 = vst [vmem:[#allocation2 + $0x28] sm:$0xff] %v362
    %379 = vst [vmem:[#allocation2 + $0x30] sm:$0xff] %v363
    %380 = vst [vmem:[#allocation2 + $0x38] sm:$0xff] %v364
    %381 = vst [vmem:[#allocation2 + $0x40] sm:$0xff] %v365
    %382 = vst [vmem:[#allocation2 + $0x48] sm:$0xff] %v366
    %383 = vst [vmem:[#allocation2 + $0x50] sm:$0xff] %v367
    %384 = vst [vmem:[#allocation2 + $0x58] sm:$0xff] %v368
    %385 = vst [vmem:[#allocation2 + $0x60] sm:$0xff] %v369
    %386 = vst [vmem:[#allocation2 + $0x68] sm:$0xff] %v370
    %387 = vst [vmem:[#allocation2 + $0x70] sm:$0xff] %v371
    %388 = vst [vmem:[#allocation2 + $0x78] sm:$0xff] %v372
    // Predicated region
    $region54: #{tpu_custom_call.1} parent=1 // pred_check
      %p389 = pneg %p96
    $region55: #{tpu_custom_call.1} parent=1 // pred_check_branch
      %391 = sbr.rel (%p389) target = $region57
    $region56: #{tpu_custom_call.1} parent=1 // pred_region
      %v392 = vld [vmem:[#allocation9] sm:$0xff]
      %v393 = vld [vmem:[#allocation9 + $0x8] sm:$0xff]
      %v394 = vld [vmem:[#allocation9 + $0x10] sm:$0xff]
      %v395 = vld [vmem:[#allocation9 + $0x18] sm:$0xff]
      %v396 = vld [vmem:[#allocation9 + $0x20] sm:$0xff]
      %v397 = vld [vmem:[#allocation9 + $0x28] sm:$0xff]
      %v398 = vld [vmem:[#allocation9 + $0x30] sm:$0xff]
      %v399 = vld [vmem:[#allocation9 + $0x38] sm:$0xff]
      %v400 = vld [vmem:[#allocation9 + $0x40] sm:$0xff]
      %v401 = vld [vmem:[#allocation9 + $0x48] sm:$0xff]
      %v402 = vld [vmem:[#allocation9 + $0x50] sm:$0xff]
      %v403 = vld [vmem:[#allocation9 + $0x58] sm:$0xff]
      %v404 = vld [vmem:[#allocation9 + $0x60] sm:$0xff]
      %v405 = vld [vmem:[#allocation9 + $0x68] sm:$0xff]
      %v406 = vld [vmem:[#allocation9 + $0x70] sm:$0xff]
      %v407 = vld [vmem:[#allocation9 + $0x78] sm:$0xff]
      %v408 = vld [vmem:[#allocation2] sm:$0xff]
      %v409 = vld [vmem:[#allocation2 + $0x8] sm:$0xff]
      %v410 = vld [vmem:[#allocation2 + $0x10] sm:$0xff]
      %v411 = vld [vmem:[#allocation2 + $0x18] sm:$0xff]
      %v412 = vld [vmem:[#allocation2 + $0x20] sm:$0xff]
      %v413 = vld [vmem:[#allocation2 + $0x28] sm:$0xff]
      %v414 = vld [vmem:[#allocation2 + $0x30] sm:$0xff]
      %v415 = vld [vmem:[#allocation2 + $0x38] sm:$0xff]
      %v416 = vld [vmem:[#allocation2 + $0x40] sm:$0xff]
      %v417 = vld [vmem:[#allocation2 + $0x48] sm:$0xff]
      %v418 = vld [vmem:[#allocation2 + $0x50] sm:$0xff]
      %v419 = vld [vmem:[#allocation2 + $0x58] sm:$0xff]
      %v420 = vld [vmem:[#allocation2 + $0x60] sm:$0xff]
      %v421 = vld [vmem:[#allocation2 + $0x68] sm:$0xff]
      %v422 = vld [vmem:[#allocation2 + $0x70] sm:$0xff]
      %v423 = vld [vmem:[#allocation2 + $0x78] sm:$0xff]
      %v424 = vpack.c.bf16 %v409, %v408
      %v425 = vpack.c.bf16 %v411, %v410
      %v426 = vpack.c.bf16 %v413, %v412
      %v427 = vpack.c.bf16 %v415, %v414
      %v428 = vpack.c.bf16 %v417, %v416
      %v429 = vpack.c.bf16 %v419, %v418
      %v430 = vpack.c.bf16 %v421, %v420
      %v431 = vpack.c.bf16 %v423, %v422
      %v432 = vld [vmem:[#allocation10] sm:$0xf]
      %v433 = vld [vmem:[#allocation10 + $0x4] sm:$0xf]
      %v434 = vld [vmem:[#allocation10 + $0x8] sm:$0xf]
      %v435 = vld [vmem:[#allocation10 + $0xc] sm:$0xf]
      %v436 = vld [vmem:[#allocation10 + $0x10] sm:$0xf]
      %v437 = vld [vmem:[#allocation10 + $0x14] sm:$0xf]
      %v438 = vld [vmem:[#allocation10 + $0x18] sm:$0xf]
      %v439 = vld [vmem:[#allocation10 + $0x1c] sm:$0xf]
      %v440 = vld [vmem:[#allocation10 + $0x20] sm:$0xf]
      %v441 = vld [vmem:[#allocation10 + $0x24] sm:$0xf]
      %v442 = vld [vmem:[#allocation10 + $0x28] sm:$0xf]
      %v443 = vld [vmem:[#allocation10 + $0x2c] sm:$0xf]
      %v444 = vld [vmem:[#allocation10 + $0x30] sm:$0xf]
      %v445 = vld [vmem:[#allocation10 + $0x34] sm:$0xf]
      %v446 = vld [vmem:[#allocation10 + $0x38] sm:$0xf]
      %v447 = vld [vmem:[#allocation10 + $0x3c] sm:$0xf]
      %v448 = vld [vmem:[%s4] sm:$0x1]
      %v450 = vlaneseq
      %v451 = vshrl.u32 %v450, 7
      %v452 = vsub.s32 0, %v451
      %v453 = vrot.slane %v448, %v452
      %v471 = vunpack.c.l.b16 %v432
      %v472 = vunpack.c.l.b16 %v433
      %v473 = vunpack.c.l.b16 %v434
      %v474 = vunpack.c.l.b16 %v435
      %v475 = vunpack.c.l.b16 %v436
      %v476 = vunpack.c.l.b16 %v437
      %v477 = vunpack.c.l.b16 %v438
      %v478 = vunpack.c.l.b16 %v439
      %v479 = vunpack.c.l.b16 %v440
      %v480 = vunpack.c.l.b16 %v441
      %v481 = vunpack.c.l.b16 %v442
      %v482 = vunpack.c.l.b16 %v443
      %v483 = vunpack.c.l.b16 %v444
      %v484 = vunpack.c.l.b16 %v445
      %v485 = vunpack.c.l.b16 %v446
      %v486 = vunpack.c.l.b16 %v447
      %v487 = vpack.c.b16 %v472, %v471
      %v488 = vpack.c.b16 %v474, %v473
      %v489 = vpack.c.b16 %v476, %v475
      %v490 = vpack.c.b16 %v478, %v477
      %v491 = vpack.c.b16 %v480, %v479
      %v492 = vpack.c.b16 %v482, %v481
      %v493 = vpack.c.b16 %v484, %v483
      %v494 = vpack.c.b16 %v486, %v485
      %503 = vmatprep.subr.bf16.mxu0 0
      %504 = vmatpush1.bf16.msra.mxu0 %v494
      %505 = vmatprep.subr.bf16.mxu0 0
      %506 = vmatpush1.bf16.msra.mxu0 %v493
      %507 = vmatprep.subr.bf16.mxu0 0
      %508 = vmatpush1.bf16.msra.mxu0 %v492
      %509 = vmatprep.subr.bf16.mxu0 0
      %510 = vmatpush1.bf16.msra.mxu0 %v491
      %511 = vmatprep.subr.bf16.mxu0 0
      %512 = vmatpush1.bf16.msra.mxu0 %v490
      %513 = vmatprep.subr.bf16.mxu0 0
      %514 = vmatpush1.bf16.msra.mxu0 %v489
      %515 = vmatprep.subr.bf16.mxu0 0
      %516 = vmatpush1.bf16.msra.mxu0 %v488
      %517 = vmatprep.subr.bf16.mxu0 0
      %518 = vmatpush1.bf16.msra.mxu0 %v487
      %519 = vmatprep.subr.bf16.mxu0 0
      %520 = vmatpush2.bf16.msra.mxu0 0
      %521 = vmatprep.subr.bf16.mxu0 0
      %522 = vmatpush2.bf16.msra.mxu0 0
      %523 = vmatprep.subr.bf16.mxu0 0
      %524 = vmatpush2.bf16.msra.mxu0 0
      %525 = vmatprep.subr.bf16.mxu0 0
      %526 = vmatpush2.bf16.msra.mxu0 0
      %527 = vmatprep.subr.bf16.mxu0 0
      %528 = vmatpush2.bf16.msra.mxu0 0
      %529 = vmatprep.subr.bf16.mxu0 0
      %530 = vmatpush2.bf16.msra.mxu0 0
      %531 = vmatprep.subr.bf16.mxu0 0
      %532 = vmatpush2.bf16.msra.mxu0 0
      %533 = vmatprep.subr.bf16.mxu0 0
      %534 = vmatpush2.bf16.msra.mxu0 0
      %535 = vmatprep.mubr.bf16.mxu0 0
      %536 = vmatmul.mubr.bf16.gmra.mxu0 %v424
      %v537 = vpop.f32.mrf.mxu0
      %v538 = vadd.f32 %v453, %v537
      %v539 = vpop.f32.mrf.mxu0
      %v540 = vpop.f32.mrf.mxu0
      %v541 = vadd.f32 %v453, %v540
      %v542 = vpop.f32.mrf.mxu0
      %543 = vmatprep.mubr.bf16.mxu0 0
      %544 = vmatmul.mubr.bf16.gmra.mxu0 %v425
      %v545 = vpop.f32.mrf.mxu0
      %v546 = vadd.f32 %v453, %v545
      %v547 = vpop.f32.mrf.mxu0
      %v548 = vpop.f32.mrf.mxu0
      %v549 = vadd.f32 %v453, %v548
      %v550 = vpop.f32.mrf.mxu0
      %551 = vmatprep.mubr.bf16.mxu0 0
      %552 = vmatmul.mubr.bf16.gmra.mxu0 %v426
      %v553 = vpop.f32.mrf.mxu0
      %v554 = vadd.f32 %v453, %v553
      %v555 = vpop.f32.mrf.mxu0
      %v556 = vpop.f32.mrf.mxu0
      %v557 = vadd.f32 %v453, %v556
      %v558 = vpop.f32.mrf.mxu0
      %559 = vmatprep.mubr.bf16.mxu0 0
      %560 = vmatmul.mubr.bf16.gmra.mxu0 %v427
      %v561 = vpop.f32.mrf.mxu0
      %v562 = vadd.f32 %v453, %v561
      %v563 = vpop.f32.mrf.mxu0
      %v564 = vpop.f32.mrf.mxu0
      %v565 = vadd.f32 %v453, %v564
      %v566 = vpop.f32.mrf.mxu0
      %567 = vmatprep.mubr.bf16.mxu0 0
      %568 = vmatmul.mubr.bf16.gmra.mxu0 %v428
      %v569 = vpop.f32.mrf.mxu0
      %v570 = vadd.f32 %v453, %v569
      %v571 = vpop.f32.mrf.mxu0
      %v572 = vpop.f32.mrf.mxu0
      %v573 = vadd.f32 %v453, %v572
      %v574 = vpop.f32.mrf.mxu0
      %575 = vmatprep.mubr.bf16.mxu0 0
      %576 = vmatmul.mubr.bf16.gmra.mxu0 %v429
      %v577 = vpop.f32.mrf.mxu0
      %v578 = vadd.f32 %v453, %v577
      %v579 = vpop.f32.mrf.mxu0
      %v580 = vpop.f32.mrf.mxu0
      %v581 = vadd.f32 %v453, %v580
      %v582 = vpop.f32.mrf.mxu0
      %583 = vmatprep.mubr.bf16.mxu0 0
      %584 = vmatmul.mubr.bf16.gmra.mxu0 %v430
      %v585 = vpop.f32.mrf.mxu0
      %v586 = vadd.f32 %v453, %v585
      %v587 = vpop.f32.mrf.mxu0
      %v588 = vpop.f32.mrf.mxu0
      %v589 = vadd.f32 %v453, %v588
      %v590 = vpop.f32.mrf.mxu0
      %591 = vmatprep.mubr.bf16.mxu0 0
      %592 = vmatmul.mubr.bf16.gmra.mxu0 %v431
      %v593 = vpop.f32.mrf.mxu0
      %v594 = vadd.f32 %v453, %v593
      %v595 = vpop.f32.mrf.mxu0
      %v596 = vpop.f32.mrf.mxu0
      %v597 = vadd.f32 %v453, %v596
      %v598 = vpop.f32.mrf.mxu0
      %599 = vdwg.mxu0
      %v600 = vmax.f32 %v538, 0.0
      %v601 = vmax.f32 %v541, 0.0
      %v602 = vmax.f32 %v546, 0.0
      %v603 = vmax.f32 %v549, 0.0
      %v604 = vmax.f32 %v554, 0.0
      %v605 = vmax.f32 %v557, 0.0
      %v606 = vmax.f32 %v562, 0.0
      %v607 = vmax.f32 %v565, 0.0
      %v608 = vmax.f32 %v570, 0.0
      %v609 = vmax.f32 %v573, 0.0
      %v610 = vmax.f32 %v578, 0.0
      %v611 = vmax.f32 %v581, 0.0
      %v612 = vmax.f32 %v586, 0.0
      %v613 = vmax.f32 %v589, 0.0
      %v614 = vmax.f32 %v594, 0.0
      %v615 = vmax.f32 %v597, 0.0
      %v616 = vpack.c.bf16 %v601, %v600
      %v617 = vpack.c.bf16 %v603, %v602
      %v618 = vpack.c.bf16 %v605, %v604
      %v619 = vpack.c.bf16 %v607, %v606
      %v620 = vpack.c.bf16 %v609, %v608
      %v621 = vpack.c.bf16 %v611, %v610
      %v622 = vpack.c.bf16 %v613, %v612
      %v623 = vpack.c.bf16 %v615, %v614
      %v632 = vunpack.c.l.b16 %v616
      %v633 = vunpack.c.h.b16 %v616
      %v634 = vunpack.c.l.b16 %v617
      %v635 = vunpack.c.h.b16 %v617
      %v636 = vunpack.c.l.b16 %v618
      %v637 = vunpack.c.h.b16 %v618
      %v638 = vunpack.c.l.b16 %v619
      %v639 = vunpack.c.h.b16 %v619
      %v640 = vunpack.c.l.b16 %v620
      %v641 = vunpack.c.h.b16 %v620
      %v642 = vunpack.c.l.b16 %v621
      %v643 = vunpack.c.h.b16 %v621
      %v644 = vunpack.c.l.b16 %v622
      %v645 = vunpack.c.h.b16 %v622
      %v646 = vunpack.c.l.b16 %v623
      %v647 = vunpack.c.h.b16 %v623
      %v648 = vpack.c.b16 %v632, %v632
      %v649 = vpack.c.b16 %v633, %v633
      %v650 = vpack.c.b16 %v634, %v634
      %v651 = vpack.c.b16 %v635, %v635
      %v652 = vpack.c.b16 %v636, %v636
      %v653 = vpack.c.b16 %v637, %v637
      %v654 = vpack.c.b16 %v638, %v638
      %v655 = vpack.c.b16 %v639, %v639
      %v656 = vpack.c.b16 %v640, %v640
      %v657 = vpack.c.b16 %v641, %v641
      %v658 = vpack.c.b16 %v642, %v642
      %v659 = vpack.c.b16 %v643, %v643
      %v660 = vpack.c.b16 %v644, %v644
      %v661 = vpack.c.b16 %v645, %v645
      %v662 = vpack.c.b16 %v646, %v646
      %v663 = vpack.c.b16 %v647, %v647
      %680 = vst [vmem:[#allocation3] sm:$0xf] %v648
      %681 = vst [vmem:[#allocation3 + $0x8] sm:$0xf] %v649
      %682 = vst [vmem:[#allocation3 + $0x10] sm:$0xf] %v650
      %683 = vst [vmem:[#allocation3 + $0x18] sm:$0xf] %v651
      %684 = vst [vmem:[#allocation3 + $0x20] sm:$0xf] %v652
      %685 = vst [vmem:[#allocation3 + $0x28] sm:$0xf] %v653
      %686 = vst [vmem:[#allocation3 + $0x30] sm:$0xf] %v654
      %687 = vst [vmem:[#allocation3 + $0x38] sm:$0xf] %v655
      %688 = vst [vmem:[#allocation3 + $0x40] sm:$0xf] %v656
      %689 = vst [vmem:[#allocation3 + $0x48] sm:$0xf] %v657
      %690 = vst [vmem:[#allocation3 + $0x50] sm:$0xf] %v658
      %691 = vst [vmem:[#allocation3 + $0x58] sm:$0xf] %v659
      %692 = vst [vmem:[#allocation3 + $0x60] sm:$0xf] %v660
      %693 = vst [vmem:[#allocation3 + $0x68] sm:$0xf] %v661
      %694 = vst [vmem:[#allocation3 + $0x70] sm:$0xf] %v662
      %695 = vst [vmem:[#allocation3 + $0x78] sm:$0xf] %v663
      %v696 = vpack.c.bf16 %v393, %v392
      %v697 = vpack.c.bf16 %v395, %v394
      %v698 = vpack.c.bf16 %v397, %v396
      %v699 = vpack.c.bf16 %v399, %v398
      %v700 = vpack.c.bf16 %v401, %v400
      %v701 = vpack.c.bf16 %v403, %v402
      %v702 = vpack.c.bf16 %v405, %v404
      %v703 = vpack.c.bf16 %v407, %v406
      %v712 = vunpack.c.l.b16 %v696
      %v713 = vunpack.c.h.b16 %v696
      %v714 = vunpack.c.l.b16 %v697
      %v715 = vunpack.c.h.b16 %v697
      %v716 = vunpack.c.l.b16 %v698
      %v717 = vunpack.c.h.b16 %v698
      %v718 = vunpack.c.l.b16 %v699
      %v719 = vunpack.c.h.b16 %v699
      %v720 = vunpack.c.l.b16 %v700
      %v721 = vunpack.c.h.b16 %v700
      %v722 = vunpack.c.l.b16 %v701
      %v723 = vunpack.c.h.b16 %v701
      %v724 = vunpack.c.l.b16 %v702
      %v725 = vunpack.c.h.b16 %v702
      %v726 = vunpack.c.l.b16 %v703
      %v727 = vunpack.c.h.b16 %v703
      %v728 = vpack.c.b16 %v712, %v712
      %v729 = vpack.c.b16 %v713, %v713
      %v730 = vpack.c.b16 %v714, %v714
      %v731 = vpack.c.b16 %v715, %v715
      %v732 = vpack.c.b16 %v716, %v716
      %v733 = vpack.c.b16 %v717, %v717
      %v734 = vpack.c.b16 %v718, %v718
      %v735 = vpack.c.b16 %v719, %v719
      %v736 = vpack.c.b16 %v720, %v720
      %v737 = vpack.c.b16 %v721, %v721
      %v738 = vpack.c.b16 %v722, %v722
      %v739 = vpack.c.b16 %v723, %v723
      %v740 = vpack.c.b16 %v724, %v724
      %v741 = vpack.c.b16 %v725, %v725
      %v742 = vpack.c.b16 %v726, %v726
      %v743 = vpack.c.b16 %v727, %v727
      %760 = vst [vmem:[#allocation3 + $0x4] sm:$0xf] %v728
      %761 = vst [vmem:[#allocation3 + $0xc] sm:$0xf] %v729
      %762 = vst [vmem:[#allocation3 + $0x14] sm:$0xf] %v730
      %763 = vst [vmem:[#allocation3 + $0x1c] sm:$0xf] %v731
      %764 = vst [vmem:[#allocation3 + $0x24] sm:$0xf] %v732
      %765 = vst [vmem:[#allocation3 + $0x2c] sm:$0xf] %v733
      %766 = vst [vmem:[#allocation3 + $0x34] sm:$0xf] %v734
      %767 = vst [vmem:[#allocation3 + $0x3c] sm:$0xf] %v735
      %768 = vst [vmem:[#allocation3 + $0x44] sm:$0xf] %v736
      %769 = vst [vmem:[#allocation3 + $0x4c] sm:$0xf] %v737
      %770 = vst [vmem:[#allocation3 + $0x54] sm:$0xf] %v738
      %771 = vst [vmem:[#allocation3 + $0x5c] sm:$0xf] %v739
      %772 = vst [vmem:[#allocation3 + $0x64] sm:$0xf] %v740
      %773 = vst [vmem:[#allocation3 + $0x6c] sm:$0xf] %v741
      %774 = vst [vmem:[#allocation3 + $0x74] sm:$0xf] %v742
      %775 = vst [vmem:[#allocation3 + $0x7c] sm:$0xf] %v743
      %v776 = vld [vmem:[#allocation3] sm:$0xff]
      %v777 = vld [vmem:[#allocation3 + $0x8] sm:$0xff]
      %v778 = vld [vmem:[#allocation3 + $0x10] sm:$0xff]
      %v779 = vld [vmem:[#allocation3 + $0x18] sm:$0xff]
      %v780 = vld [vmem:[#allocation3 + $0x20] sm:$0xff]
      %v781 = vld [vmem:[#allocation3 + $0x28] sm:$0xff]
      %v782 = vld [vmem:[#allocation3 + $0x30] sm:$0xff]
      %v783 = vld [vmem:[#allocation3 + $0x38] sm:$0xff]
      %v784 = vld [vmem:[#allocation3 + $0x40] sm:$0xff]
      %v785 = vld [vmem:[#allocation3 + $0x48] sm:$0xff]
      %v786 = vld [vmem:[#allocation3 + $0x50] sm:$0xff]
      %v787 = vld [vmem:[#allocation3 + $0x58] sm:$0xff]
      %v788 = vld [vmem:[#allocation3 + $0x60] sm:$0xff]
      %v789 = vld [vmem:[#allocation3 + $0x68] sm:$0xff]
      %v790 = vld [vmem:[#allocation3 + $0x70] sm:$0xff]
      %v791 = vld [vmem:[#allocation3 + $0x78] sm:$0xff]
      %v792 = vld [vmem:[#allocation12] sm:$0xff]
      %v793 = vld [vmem:[#allocation12 + $0x8] sm:$0xff]
      %v794 = vld [vmem:[#allocation12 + $0x10] sm:$0xff]
      %v795 = vld [vmem:[#allocation12 + $0x18] sm:$0xff]
      %v796 = vld [vmem:[#allocation12 + $0x20] sm:$0xff]
      %v797 = vld [vmem:[#allocation12 + $0x28] sm:$0xff]
      %v798 = vld [vmem:[#allocation12 + $0x30] sm:$0xff]
      %v799 = vld [vmem:[#allocation12 + $0x38] sm:$0xff]
      %v800 = vld [vmem:[#allocation12 + $0x40] sm:$0xff]
      %v801 = vld [vmem:[#allocation12 + $0x48] sm:$0xff]
      %v802 = vld [vmem:[#allocation12 + $0x50] sm:$0xff]
      %v803 = vld [vmem:[#allocation12 + $0x58] sm:$0xff]
      %v804 = vld [vmem:[#allocation12 + $0x60] sm:$0xff]
      %v805 = vld [vmem:[#allocation12 + $0x68] sm:$0xff]
      %v806 = vld [vmem:[#allocation12 + $0x70] sm:$0xff]
      %v807 = vld [vmem:[#allocation12 + $0x78] sm:$0xff]
      %v808 = vld [vmem:[#allocation12 + $0x80] sm:$0xff]
      %v809 = vld [vmem:[#allocation12 + $0x88] sm:$0xff]
      %v810 = vld [vmem:[#allocation12 + $0x90] sm:$0xff]
      %v811 = vld [vmem:[#allocation12 + $0x98] sm:$0xff]
      %v812 = vld [vmem:[#allocation12 + $0xa0] sm:$0xff]
      %v813 = vld [vmem:[#allocation12 + $0xa8] sm:$0xff]
      %v814 = vld [vmem:[#allocation12 + $0xb0] sm:$0xff]
      %v815 = vld [vmem:[#allocation12 + $0xb8] sm:$0xff]
      %v816 = vld [vmem:[#allocation12 + $0xc0] sm:$0xff]
      %v817 = vld [vmem:[#allocation12 + $0xc8] sm:$0xff]
      %v818 = vld [vmem:[#allocation12 + $0xd0] sm:$0xff]
      %v819 = vld [vmem:[#allocation12 + $0xd8] sm:$0xff]
      %v820 = vld [vmem:[#allocation12 + $0xe0] sm:$0xff]
      %v821 = vld [vmem:[#allocation12 + $0xe8] sm:$0xff]
      %v822 = vld [vmem:[#allocation12 + $0xf0] sm:$0xff]
      %v823 = vld [vmem:[#allocation12 + $0xf8] sm:$0xff]
      %v824 = vld [vmem:[#allocation12 + $0x100] sm:$0xff]
      %v825 = vld [vmem:[#allocation12 + $0x108] sm:$0xff]
      %v826 = vld [vmem:[#allocation12 + $0x110] sm:$0xff]
      %v827 = vld [vmem:[#allocation12 + $0x118] sm:$0xff]
      %v828 = vld [vmem:[#allocation12 + $0x120] sm:$0xff]
      %v829 = vld [vmem:[#allocation12 + $0x128] sm:$0xff]
      %v830 = vld [vmem:[#allocation12 + $0x130] sm:$0xff]
      %v831 = vld [vmem:[#allocation12 + $0x138] sm:$0xff]
      %v832 = vld [vmem:[#allocation12 + $0x140] sm:$0xff]
      %v833 = vld [vmem:[#allocation12 + $0x148] sm:$0xff]
      %v834 = vld [vmem:[#allocation12 + $0x150] sm:$0xff]
      %v835 = vld [vmem:[#allocation12 + $0x158] sm:$0xff]
      %v836 = vld [vmem:[#allocation12 + $0x160] sm:$0xff]
      %v837 = vld [vmem:[#allocation12 + $0x168] sm:$0xff]
      %v838 = vld [vmem:[#allocation12 + $0x170] sm:$0xff]
      %v839 = vld [vmem:[#allocation12 + $0x178] sm:$0xff]
      %v840 = vld [vmem:[#allocation12 + $0x180] sm:$0xff]
      %v841 = vld [vmem:[#allocation12 + $0x188] sm:$0xff]
      %v842 = vld [vmem:[#allocation12 + $0x190] sm:$0xff]
      %v843 = vld [vmem:[#allocation12 + $0x198] sm:$0xff]
      %v844 = vld [vmem:[#allocation12 + $0x1a0] sm:$0xff]
      %v845 = vld [vmem:[#allocation12 + $0x1a8] sm:$0xff]
      %v846 = vld [vmem:[#allocation12 + $0x1b0] sm:$0xff]
      %v847 = vld [vmem:[#allocation12 + $0x1b8] sm:$0xff]
      %v848 = vld [vmem:[#allocation12 + $0x1c0] sm:$0xff]
      %v849 = vld [vmem:[#allocation12 + $0x1c8] sm:$0xff]
      %v850 = vld [vmem:[#allocation12 + $0x1d0] sm:$0xff]
      %v851 = vld [vmem:[#allocation12 + $0x1d8] sm:$0xff]
      %v852 = vld [vmem:[#allocation12 + $0x1e0] sm:$0xff]
      %v853 = vld [vmem:[#allocation12 + $0x1e8] sm:$0xff]
      %v854 = vld [vmem:[#allocation12 + $0x1f0] sm:$0xff]
      %v855 = vld [vmem:[#allocation12 + $0x1f8] sm:$0xff]
      %v856 = vld [vmem:[%s6] sm:$0xf]
      %v858 = vlaneseq
      %v859 = vshrl.u32 %v858, 7
      %v860 = vsub.s32 0, %v859
      %v861 = vrot.slane %v856, %v860
      %v862 = vlaneseq
      %v863 = vshrl.u32 %v862, 7
      %v864 = vsub.s32 1, %v863
      %v865 = vrot.slane %v856, %v864
      %v866 = vlaneseq
      %v867 = vshrl.u32 %v866, 7
      %v868 = vsub.s32 2, %v867
      %v869 = vrot.slane %v856, %v868
      %v870 = vlaneseq
      %v871 = vshrl.u32 %v870, 7
      %v872 = vsub.s32 3, %v871
      %v873 = vrot.slane %v856, %v872
      %v894 = vunpack.c.l.b16 %v776
      %v895 = vunpack.c.h.b16 %v776
      %v896 = vunpack.c.l.b16 %v777
      %v897 = vunpack.c.h.b16 %v777
      %v898 = vunpack.c.l.b16 %v778
      %v899 = vunpack.c.h.b16 %v778
      %v900 = vunpack.c.l.b16 %v779
      %v901 = vunpack.c.h.b16 %v779
      %v902 = vunpack.c.l.b16 %v780
      %v903 = vunpack.c.h.b16 %v780
      %v904 = vunpack.c.l.b16 %v781
      %v905 = vunpack.c.h.b16 %v781
      %v906 = vunpack.c.l.b16 %v782
      %v907 = vunpack.c.h.b16 %v782
      %v908 = vunpack.c.l.b16 %v783
      %v909 = vunpack.c.h.b16 %v783
      %v910 = vunpack.c.l.b16 %v784
      %v911 = vunpack.c.h.b16 %v784
      %v912 = vunpack.c.l.b16 %v785
      %v913 = vunpack.c.h.b16 %v785
      %v914 = vunpack.c.l.b16 %v786
      %v915 = vunpack.c.h.b16 %v786
      %v916 = vunpack.c.l.b16 %v787
      %v917 = vunpack.c.h.b16 %v787
      %v918 = vunpack.c.l.b16 %v788
      %v919 = vunpack.c.h.b16 %v788
      %v920 = vunpack.c.l.b16 %v789
      %v921 = vunpack.c.h.b16 %v789
      %v922 = vunpack.c.l.b16 %v790
      %v923 = vunpack.c.h.b16 %v790
      %v924 = vunpack.c.l.b16 %v791
      %v925 = vunpack.c.h.b16 %v791
      %v926 = vpack.c.b16 %v896, %v894
      %v927 = vpack.c.b16 %v897, %v895
      %v928 = vpack.c.b16 %v900, %v898
      %v929 = vpack.c.b16 %v901, %v899
      %v930 = vpack.c.b16 %v904, %v902
      %v931 = vpack.c.b16 %v905, %v903
      %v932 = vpack.c.b16 %v908, %v906
      %v933 = vpack.c.b16 %v909, %v907
      %v934 = vpack.c.b16 %v912, %v910
      %v935 = vpack.c.b16 %v913, %v911
      %v936 = vpack.c.b16 %v916, %v914
      %v937 = vpack.c.b16 %v917, %v915
      %v938 = vpack.c.b16 %v920, %v918
      %v939 = vpack.c.b16 %v921, %v919
      %v940 = vpack.c.b16 %v924, %v922
      %v941 = vpack.c.b16 %v925, %v923
      %v1022 = vunpack.c.l.b16 %v792
      %v1023 = vunpack.c.h.b16 %v792
      %v1024 = vunpack.c.l.b16 %v793
      %v1025 = vunpack.c.h.b16 %v793
      %v1026 = vunpack.c.l.b16 %v794
      %v1027 = vunpack.c.h.b16 %v794
      %v1028 = vunpack.c.l.b16 %v795
      %v1029 = vunpack.c.h.b16 %v795
      %v1030 = vunpack.c.l.b16 %v796
      %v1031 = vunpack.c.h.b16 %v796
      %v1032 = vunpack.c.l.b16 %v797
      %v1033 = vunpack.c.h.b16 %v797
      %v1034 = vunpack.c.l.b16 %v798
      %v1035 = vunpack.c.h.b16 %v798
      %v1036 = vunpack.c.l.b16 %v799
      %v1037 = vunpack.c.h.b16 %v799
      %v1038 = vunpack.c.l.b16 %v800
      %v1039 = vunpack.c.h.b16 %v800
      %v1040 = vunpack.c.l.b16 %v801
      %v1041 = vunpack.c.h.b16 %v801
      %v1042 = vunpack.c.l.b16 %v802
      %v1043 = vunpack.c.h.b16 %v802
      %v1044 = vunpack.c.l.b16 %v803
      %v1045 = vunpack.c.h.b16 %v803
      %v1046 = vunpack.c.l.b16 %v804
      %v1047 = vunpack.c.h.b16 %v804
      %v1048 = vunpack.c.l.b16 %v805
      %v1049 = vunpack.c.h.b16 %v805
      %v1050 = vunpack.c.l.b16 %v806
      %v1051 = vunpack.c.h.b16 %v806
      %v1052 = vunpack.c.l.b16 %v807
      %v1053 = vunpack.c.h.b16 %v807
      %v1054 = vunpack.c.l.b16 %v808
      %v1055 = vunpack.c.h.b16 %v808
      %v1056 = vunpack.c.l.b16 %v809
      %v1057 = vunpack.c.h.b16 %v809
      %v1058 = vunpack.c.l.b16 %v810
      %v1059 = vunpack.c.h.b16 %v810
      %v1060 = vunpack.c.l.b16 %v811
      %v1061 = vunpack.c.h.b16 %v811
      %v1062 = vunpack.c.l.b16 %v812
      %v1063 = vunpack.c.h.b16 %v812
      %v1064 = vunpack.c.l.b16 %v813
      %v1065 = vunpack.c.h.b16 %v813
      %v1066 = vunpack.c.l.b16 %v814
      %v1067 = vunpack.c.h.b16 %v814
      %v1068 = vunpack.c.l.b16 %v815
      %v1069 = vunpack.c.h.b16 %v815
      %v1070 = vunpack.c.l.b16 %v816
      %v1071 = vunpack.c.h.b16 %v816
      %v1072 = vunpack.c.l.b16 %v817
      %v1073 = vunpack.c.h.b16 %v817
      %v1074 = vunpack.c.l.b16 %v818
      %v1075 = vunpack.c.h.b16 %v818
      %v1076 = vunpack.c.l.b16 %v819
      %v1077 = vunpack.c.h.b16 %v819
      %v1078 = vunpack.c.l.b16 %v820
      %v1079 = vunpack.c.h.b16 %v820
      %v1080 = vunpack.c.l.b16 %v821
      %v1081 = vunpack.c.h.b16 %v821
      %v1082 = vunpack.c.l.b16 %v822
      %v1083 = vunpack.c.h.b16 %v822
      %v1084 = vunpack.c.l.b16 %v823
      %v1085 = vunpack.c.h.b16 %v823
      %v1086 = vunpack.c.l.b16 %v824
      %v1087 = vunpack.c.h.b16 %v824
      %v1088 = vunpack.c.l.b16 %v825
      %v1089 = vunpack.c.h.b16 %v825
      %v1090 = vunpack.c.l.b16 %v826
      %v1091 = vunpack.c.h.b16 %v826
      %v1092 = vunpack.c.l.b16 %v827
      %v1093 = vunpack.c.h.b16 %v827
      %v1094 = vunpack.c.l.b16 %v828
      %v1095 = vunpack.c.h.b16 %v828
      %v1096 = vunpack.c.l.b16 %v829
      %v1097 = vunpack.c.h.b16 %v829
      %v1098 = vunpack.c.l.b16 %v830
      %v1099 = vunpack.c.h.b16 %v830
      %v1100 = vunpack.c.l.b16 %v831
      %v1101 = vunpack.c.h.b16 %v831
      %v1102 = vunpack.c.l.b16 %v832
      %v1103 = vunpack.c.h.b16 %v832
      %v1104 = vunpack.c.l.b16 %v833
      %v1105 = vunpack.c.h.b16 %v833
      %v1106 = vunpack.c.l.b16 %v834
      %v1107 = vunpack.c.h.b16 %v834
      %v1108 = vunpack.c.l.b16 %v835
      %v1109 = vunpack.c.h.b16 %v835
      %v1110 = vunpack.c.l.b16 %v836
      %v1111 = vunpack.c.h.b16 %v836
      %v1112 = vunpack.c.l.b16 %v837
      %v1113 = vunpack.c.h.b16 %v837
      %v1114 = vunpack.c.l.b16 %v838
      %v1115 = vunpack.c.h.b16 %v838
      %v1116 = vunpack.c.l.b16 %v839
      %v1117 = vunpack.c.h.b16 %v839
      %v1118 = vunpack.c.l.b16 %v840
      %v1119 = vunpack.c.h.b16 %v840
      %v1120 = vunpack.c.l.b16 %v841
      %v1121 = vunpack.c.h.b16 %v841
      %v1122 = vunpack.c.l.b16 %v842
      %v1123 = vunpack.c.h.b16 %v842
      %v1124 = vunpack.c.l.b16 %v843
      %v1125 = vunpack.c.h.b16 %v843
      %v1126 = vunpack.c.l.b16 %v844
      %v1127 = vunpack.c.h.b16 %v844
      %v1128 = vunpack.c.l.b16 %v845
      %v1129 = vunpack.c.h.b16 %v845
      %v1130 = vunpack.c.l.b16 %v846
      %v1131 = vunpack.c.h.b16 %v846
      %v1132 = vunpack.c.l.b16 %v847
      %v1133 = vunpack.c.h.b16 %v847
      %v1134 = vunpack.c.l.b16 %v848
      %v1135 = vunpack.c.h.b16 %v848
      %v1136 = vunpack.c.l.b16 %v849
      %v1137 = vunpack.c.h.b16 %v849
      %v1138 = vunpack.c.l.b16 %v850
      %v1139 = vunpack.c.h.b16 %v850
      %v1140 = vunpack.c.l.b16 %v851
      %v1141 = vunpack.c.h.b16 %v851
      %v1142 = vunpack.c.l.b16 %v852
      %v1143 = vunpack.c.h.b16 %v852
      %v1144 = vunpack.c.l.b16 %v853
      %v1145 = vunpack.c.h.b16 %v853
      %v1146 = vunpack.c.l.b16 %v854
      %v1147 = vunpack.c.h.b16 %v854
      %v1148 = vunpack.c.l.b16 %v855
      %v1149 = vunpack.c.h.b16 %v855
      %v1150 = vpack.c.b16 %v1026, %v1022
      %v1151 = vpack.c.b16 %v1027, %v1023
      %v1152 = vpack.c.b16 %v1028, %v1024
      %v1153 = vpack.c.b16 %v1029, %v1025
      %v1154 = vpack.c.b16 %v1034, %v1030
      %v1155 = vpack.c.b16 %v1035, %v1031
      %v1156 = vpack.c.b16 %v1036, %v1032
      %v1157 = vpack.c.b16 %v1037, %v1033
      %v1158 = vpack.c.b16 %v1042, %v1038
      %v1159 = vpack.c.b16 %v1043, %v1039
      %v1160 = vpack.c.b16 %v1044, %v1040
      %v1161 = vpack.c.b16 %v1045, %v1041
      %v1162 = vpack.c.b16 %v1050, %v1046
      %v1163 = vpack.c.b16 %v1051, %v1047
      %v1164 = vpack.c.b16 %v1052, %v1048
      %v1165 = vpack.c.b16 %v1053, %v1049
      %v1166 = vpack.c.b16 %v1058, %v1054
      %v1167 = vpack.c.b16 %v1059, %v1055
      %v1168 = vpack.c.b16 %v1060, %v1056
      %v1169 = vpack.c.b16 %v1061, %v1057
      %v1170 = vpack.c.b16 %v1066, %v1062
      %v1171 = vpack.c.b16 %v1067, %v1063
      %v1172 = vpack.c.b16 %v1068, %v1064
      %v1173 = vpack.c.b16 %v1069, %v1065
      %v1174 = vpack.c.b16 %v1074, %v1070
      %v1175 = vpack.c.b16 %v1075, %v1071
      %v1176 = vpack.c.b16 %v1076, %v1072
      %v1177 = vpack.c.b16 %v1077, %v1073
      %v1178 = vpack.c.b16 %v1082, %v1078
      %v1179 = vpack.c.b16 %v1083, %v1079
      %v1180 = vpack.c.b16 %v1084, %v1080
      %v1181 = vpack.c.b16 %v1085, %v1081
      %v1182 = vpack.c.b16 %v1090, %v1086
      %v1183 = vpack.c.b16 %v1091, %v1087
      %v1184 = vpack.c.b16 %v1092, %v1088
      %v1185 = vpack.c.b16 %v1093, %v1089
      %v1186 = vpack.c.b16 %v1098, %v1094
      %v1187 = vpack.c.b16 %v1099, %v1095
      %v1188 = vpack.c.b16 %v1100, %v1096
      %v1189 = vpack.c.b16 %v1101, %v1097
      %v1190 = vpack.c.b16 %v1106, %v1102
      %v1191 = vpack.c.b16 %v1107, %v1103
      %v1192 = vpack.c.b16 %v1108, %v1104
      %v1193 = vpack.c.b16 %v1109, %v1105
      %v1194 = vpack.c.b16 %v1114, %v1110
      %v1195 = vpack.c.b16 %v1115, %v1111
      %v1196 = vpack.c.b16 %v1116, %v1112
      %v1197 = vpack.c.b16 %v1117, %v1113
      %v1198 = vpack.c.b16 %v1122, %v1118
      %v1199 = vpack.c.b16 %v1123, %v1119
      %v1200 = vpack.c.b16 %v1124, %v1120
      %v1201 = vpack.c.b16 %v1125, %v1121
      %v1202 = vpack.c.b16 %v1130, %v1126
      %v1203 = vpack.c.b16 %v1131, %v1127
      %v1204 = vpack.c.b16 %v1132, %v1128
      %v1205 = vpack.c.b16 %v1133, %v1129
      %v1206 = vpack.c.b16 %v1138, %v1134
      %v1207 = vpack.c.b16 %v1139, %v1135
      %v1208 = vpack.c.b16 %v1140, %v1136
      %v1209 = vpack.c.b16 %v1141, %v1137
      %v1210 = vpack.c.b16 %v1146, %v1142
      %v1211 = vpack.c.b16 %v1147, %v1143
      %v1212 = vpack.c.b16 %v1148, %v1144
      %v1213 = vpack.c.b16 %v1149, %v1145
      %1278 = vmatprep.subr.bf16.mxu0 %v1179
      %1279 = vmatpush1.bf16.msra.mxu0 %v1178
      %1280 = vmatprep.subr.bf16.mxu0 %v1175
      %1281 = vmatpush1.bf16.msra.mxu0 %v1174
      %1282 = vmatprep.subr.bf16.mxu0 %v1171
      %1283 = vmatpush1.bf16.msra.mxu0 %v1170
      %1284 = vmatprep.subr.bf16.mxu0 %v1167
      %1285 = vmatpush1.bf16.msra.mxu0 %v1166
      %1286 = vmatprep.subr.bf16.mxu0 %v1163
      %1287 = vmatpush1.bf16.msra.mxu0 %v1162
      %1288 = vmatprep.subr.bf16.mxu0 %v1159
      %1289 = vmatpush1.bf16.msra.mxu0 %v1158
      %1290 = vmatprep.subr.bf16.mxu0 %v1155
      %1291 = vmatpush1.bf16.msra.mxu0 %v1154
      %1292 = vmatprep.subr.bf16.mxu0 %v1151
      %1293 = vmatpush1.bf16.msra.mxu0 %v1150
      %1294 = vmatprep.subr.bf16.mxu0 %v1211
      %1295 = vmatpush2.bf16.msra.mxu0 %v1210
      %1296 = vmatprep.subr.bf16.mxu0 %v1207
      %1297 = vmatpush2.bf16.msra.mxu0 %v1206
      %1298 = vmatprep.subr.bf16.mxu0 %v1203
      %1299 = vmatpush2.bf16.msra.mxu0 %v1202
      %1300 = vmatprep.subr.bf16.mxu0 %v1199
      %1301 = vmatpush2.bf16.msra.mxu0 %v1198
      %1302 = vmatprep.subr.bf16.mxu0 %v1195
      %1303 = vmatpush2.bf16.msra.mxu0 %v1194
      %1304 = vmatprep.subr.bf16.mxu0 %v1191
      %1305 = vmatpush2.bf16.msra.mxu0 %v1190
      %1306 = vmatprep.subr.bf16.mxu0 %v1187
      %1307 = vmatpush2.bf16.msra.mxu0 %v1186
      %1308 = vmatprep.subr.bf16.mxu0 %v1183
      %1309 = vmatpush2.bf16.msra.mxu0 %v1182
      %1310 = vmatprep.mubr.bf16.mxu0 %v927
      %1311 = vmatmul.mubr.bf16.gmra.mxu0 %v926
      %v1312 = vpop.f32.mrf.mxu0
      %v1313 = vadd.f32 %v861, %v1312
      %v1314 = vpop.f32.mrf.mxu0
      %v1315 = vadd.f32 %v865, %v1314
      %v1316 = vpop.f32.mrf.mxu0
      %v1317 = vadd.f32 %v861, %v1316
      %v1318 = vpop.f32.mrf.mxu0
      %v1319 = vadd.f32 %v865, %v1318
      %1320 = vmatprep.mubr.bf16.mxu0 %v929
      %1321 = vmatmul.mubr.bf16.gmra.mxu0 %v928
      %v1322 = vpop.f32.mrf.mxu0
      %v1323 = vadd.f32 %v861, %v1322
      %v1324 = vpop.f32.mrf.mxu0
      %v1325 = vadd.f32 %v865, %v1324
      %v1326 = vpop.f32.mrf.mxu0
      %v1327 = vadd.f32 %v861, %v1326
      %v1328 = vpop.f32.mrf.mxu0
      %v1329 = vadd.f32 %v865, %v1328
      %1330 = vmatprep.mubr.bf16.mxu0 %v931
      %1331 = vmatmul.mubr.bf16.gmra.mxu0 %v930
      %v1332 = vpop.f32.mrf.mxu0
      %v1333 = vadd.f32 %v861, %v1332
      %v1334 = vpop.f32.mrf.mxu0
      %v1335 = vadd.f32 %v865, %v1334
      %v1336 = vpop.f32.mrf.mxu0
      %v1337 = vadd.f32 %v861, %v1336
      %v1338 = vpop.f32.mrf.mxu0
      %v1339 = vadd.f32 %v865, %v1338
      %1340 = vmatprep.mubr.bf16.mxu0 %v933
      %1341 = vmatmul.mubr.bf16.gmra.mxu0 %v932
      %v1342 = vpop.f32.mrf.mxu0
      %v1343 = vadd.f32 %v861, %v1342
      %v1344 = vpop.f32.mrf.mxu0
      %v1345 = vadd.f32 %v865, %v1344
      %v1346 = vpop.f32.mrf.mxu0
      %v1347 = vadd.f32 %v861, %v1346
      %v1348 = vpop.f32.mrf.mxu0
      %v1349 = vadd.f32 %v865, %v1348
      %1350 = vmatprep.mubr.bf16.mxu0 %v935
      %1351 = vmatmul.mubr.bf16.gmra.mxu0 %v934
      %v1352 = vpop.f32.mrf.mxu0
      %v1353 = vadd.f32 %v861, %v1352
      %v1354 = vpop.f32.mrf.mxu0
      %v1355 = vadd.f32 %v865, %v1354
      %v1356 = vpop.f32.mrf.mxu0
      %v1357 = vadd.f32 %v861, %v1356
      %v1358 = vpop.f32.mrf.mxu0
      %v1359 = vadd.f32 %v865, %v1358
      %1360 = vmatprep.mubr.bf16.mxu0 %v937
      %1361 = vmatmul.mubr.bf16.gmra.mxu0 %v936
      %v1362 = vpop.f32.mrf.mxu0
      %v1363 = vadd.f32 %v861, %v1362
      %v1364 = vpop.f32.mrf.mxu0
      %v1365 = vadd.f32 %v865, %v1364
      %v1366 = vpop.f32.mrf.mxu0
      %v1367 = vadd.f32 %v861, %v1366
      %v1368 = vpop.f32.mrf.mxu0
      %v1369 = vadd.f32 %v865, %v1368
      %1370 = vmatprep.mubr.bf16.mxu0 %v939
      %1371 = vmatmul.mubr.bf16.gmra.mxu0 %v938
      %v1372 = vpop.f32.mrf.mxu0
      %v1373 = vadd.f32 %v861, %v1372
      %v1374 = vpop.f32.mrf.mxu0
      %v1375 = vadd.f32 %v865, %v1374
      %v1376 = vpop.f32.mrf.mxu0
      %v1377 = vadd.f32 %v861, %v1376
      %v1378 = vpop.f32.mrf.mxu0
      %v1379 = vadd.f32 %v865, %v1378
      %1380 = vmatprep.mubr.bf16.mxu0 %v941
      %1381 = vmatmul.mubr.bf16.gmra.mxu0 %v940
      %v1382 = vpop.f32.mrf.mxu0
      %v1383 = vadd.f32 %v861, %v1382
      %v1384 = vpop.f32.mrf.mxu0
      %v1385 = vadd.f32 %v865, %v1384
      %v1386 = vpop.f32.mrf.mxu0
      %v1387 = vadd.f32 %v861, %v1386
      %v1388 = vpop.f32.mrf.mxu0
      %v1389 = vadd.f32 %v865, %v1388
      %1390 = vdwg.mxu0
      %1391 = vmatprep.subr.bf16.mxu0 %v1181
      %1392 = vmatpush1.bf16.msra.mxu0 %v1180
      %1393 = vmatprep.subr.bf16.mxu0 %v1177
      %1394 = vmatpush1.bf16.msra.mxu0 %v1176
      %1395 = vmatprep.subr.bf16.mxu0 %v1173
      %1396 = vmatpush1.bf16.msra.mxu0 %v1172
      %1397 = vmatprep.subr.bf16.mxu0 %v1169
      %1398 = vmatpush1.bf16.msra.mxu0 %v1168
      %1399 = vmatprep.subr.bf16.mxu0 %v1165
      %1400 = vmatpush1.bf16.msra.mxu0 %v1164
      %1401 = vmatprep.subr.bf16.mxu0 %v1161
      %1402 = vmatpush1.bf16.msra.mxu0 %v1160
      %1403 = vmatprep.subr.bf16.mxu0 %v1157
      %1404 = vmatpush1.bf16.msra.mxu0 %v1156
      %1405 = vmatprep.subr.bf16.mxu0 %v1153
      %1406 = vmatpush1.bf16.msra.mxu0 %v1152
      %1407 = vmatprep.subr.bf16.mxu0 %v1213
      %1408 = vmatpush2.bf16.msra.mxu0 %v1212
      %1409 = vmatprep.subr.bf16.mxu0 %v1209
      %1410 = vmatpush2.bf16.msra.mxu0 %v1208
      %1411 = vmatprep.subr.bf16.mxu0 %v1205
      %1412 = vmatpush2.bf16.msra.mxu0 %v1204
      %1413 = vmatprep.subr.bf16.mxu0 %v1201
      %1414 = vmatpush2.bf16.msra.mxu0 %v1200
      %1415 = vmatprep.subr.bf16.mxu0 %v1197
      %1416 = vmatpush2.bf16.msra.mxu0 %v1196
      %1417 = vmatprep.subr.bf16.mxu0 %v1193
      %1418 = vmatpush2.bf16.msra.mxu0 %v1192
      %1419 = vmatprep.subr.bf16.mxu0 %v1189
      %1420 = vmatpush2.bf16.msra.mxu0 %v1188
      %1421 = vmatprep.subr.bf16.mxu0 %v1185
      %1422 = vmatpush2.bf16.msra.mxu0 %v1184
      %1423 = vmatprep.mubr.bf16.mxu0 %v927
      %1424 = vmatmul.mubr.bf16.gmra.mxu0 %v926
      %v1425 = vpop.f32.mrf.mxu0
      %v1426 = vadd.f32 %v869, %v1425
      %v1427 = vpop.f32.mrf.mxu0
      %v1428 = vadd.f32 %v873, %v1427
      %v1429 = vpop.f32.mrf.mxu0
      %v1430 = vadd.f32 %v869, %v1429
      %v1431 = vpop.f32.mrf.mxu0
      %v1432 = vadd.f32 %v873, %v1431
      %1433 = vmatprep.mubr.bf16.mxu0 %v929
      %1434 = vmatmul.mubr.bf16.gmra.mxu0 %v928
      %v1435 = vpop.f32.mrf.mxu0
      %v1436 = vadd.f32 %v869, %v1435
      %v1437 = vpop.f32.mrf.mxu0
      %v1438 = vadd.f32 %v873, %v1437
      %v1439 = vpop.f32.mrf.mxu0
      %v1440 = vadd.f32 %v869, %v1439
      %v1441 = vpop.f32.mrf.mxu0
      %v1442 = vadd.f32 %v873, %v1441
      %1443 = vmatprep.mubr.bf16.mxu0 %v931
      %1444 = vmatmul.mubr.bf16.gmra.mxu0 %v930
      %v1445 = vpop.f32.mrf.mxu0
      %v1446 = vadd.f32 %v869, %v1445
      %v1447 = vpop.f32.mrf.mxu0
      %v1448 = vadd.f32 %v873, %v1447
      %v1449 = vpop.f32.mrf.mxu0
      %v1450 = vadd.f32 %v869, %v1449
      %v1451 = vpop.f32.mrf.mxu0
      %v1452 = vadd.f32 %v873, %v1451
      %1453 = vmatprep.mubr.bf16.mxu0 %v933
      %1454 = vmatmul.mubr.bf16.gmra.mxu0 %v932
      %v1455 = vpop.f32.mrf.mxu0
      %v1456 = vadd.f32 %v869, %v1455
      %v1457 = vpop.f32.mrf.mxu0
      %v1458 = vadd.f32 %v873, %v1457
      %v1459 = vpop.f32.mrf.mxu0
      %v1460 = vadd.f32 %v869, %v1459
      %v1461 = vpop.f32.mrf.mxu0
      %v1462 = vadd.f32 %v873, %v1461
      %1463 = vmatprep.mubr.bf16.mxu0 %v935
      %1464 = vmatmul.mubr.bf16.gmra.mxu0 %v934
      %v1465 = vpop.f32.mrf.mxu0
      %v1466 = vadd.f32 %v869, %v1465
      %v1467 = vpop.f32.mrf.mxu0
      %v1468 = vadd.f32 %v873, %v1467
      %v1469 = vpop.f32.mrf.mxu0
      %v1470 = vadd.f32 %v869, %v1469
      %v1471 = vpop.f32.mrf.mxu0
      %v1472 = vadd.f32 %v873, %v1471
      %1473 = vmatprep.mubr.bf16.mxu0 %v937
      %1474 = vmatmul.mubr.bf16.gmra.mxu0 %v936
      %v1475 = vpop.f32.mrf.mxu0
      %v1476 = vadd.f32 %v869, %v1475
      %v1477 = vpop.f32.mrf.mxu0
      %v1478 = vadd.f32 %v873, %v1477
      %v1479 = vpop.f32.mrf.mxu0
      %v1480 = vadd.f32 %v869, %v1479
      %v1481 = vpop.f32.mrf.mxu0
      %v1482 = vadd.f32 %v873, %v1481
      %1483 = vmatprep.mubr.bf16.mxu0 %v939
      %1484 = vmatmul.mubr.bf16.gmra.mxu0 %v938
      %v1485 = vpop.f32.mrf.mxu0
      %v1486 = vadd.f32 %v869, %v1485
      %v1487 = vpop.f32.mrf.mxu0
      %v1488 = vadd.f32 %v873, %v1487
      %v1489 = vpop.f32.mrf.mxu0
      %v1490 = vadd.f32 %v869, %v1489
      %v1491 = vpop.f32.mrf.mxu0
      %v1492 = vadd.f32 %v873, %v1491
      %1493 = vmatprep.mubr.bf16.mxu0 %v941
      %1494 = vmatmul.mubr.bf16.gmra.mxu0 %v940
      %v1495 = vpop.f32.mrf.mxu0
      %v1496 = vadd.f32 %v869, %v1495
      %v1497 = vpop.f32.mrf.mxu0
      %v1498 = vadd.f32 %v873, %v1497
      %v1499 = vpop.f32.mrf.mxu0
      %v1500 = vadd.f32 %v869, %v1499
      %v1501 = vpop.f32.mrf.mxu0
      %v1502 = vadd.f32 %v873, %v1501
      %1503 = vdwg.mxu0
      %v1504 = vxor.u32 %v1313, 2147483648
      %v1505 = vxor.u32 %v1317, 2147483648
      %v1506 = vxor.u32 %v1323, 2147483648
      %v1507 = vxor.u32 %v1327, 2147483648
      %v1508 = vxor.u32 %v1333, 2147483648
      %v1509 = vxor.u32 %v1337, 2147483648
      %v1510 = vxor.u32 %v1343, 2147483648
      %v1511 = vxor.u32 %v1347, 2147483648
      %v1512 = vxor.u32 %v1353, 2147483648
      %v1513 = vxor.u32 %v1357, 2147483648
      %v1514 = vxor.u32 %v1363, 2147483648
      %v1515 = vxor.u32 %v1367, 2147483648
      %v1516 = vxor.u32 %v1373, 2147483648
      %v1517 = vxor.u32 %v1377, 2147483648
      %v1518 = vxor.u32 %v1383, 2147483648
      %v1519 = vxor.u32 %v1387, 2147483648
      %v1520 = vmul.f32 %v1504, 1.442695
      %v1521 = vpow.pop %v1520
      %v1522 = vmul.f32 %v1505, 1.442695
      %v1523 = vpow.pop %v1522
      %v1524 = vmul.f32 %v1506, 1.442695
      %v1525 = vpow.pop %v1524
      %v1526 = vmul.f32 %v1507, 1.442695
      %v1527 = vpow.pop %v1526
      %v1528 = vmul.f32 %v1508, 1.442695
      %v1529 = vpow.pop %v1528
      %v1530 = vmul.f32 %v1509, 1.442695
      %v1531 = vpow.pop %v1530
      %v1532 = vmul.f32 %v1510, 1.442695
      %v1533 = vpow.pop %v1532
      %v1534 = vmul.f32 %v1511, 1.442695
      %v1535 = vpow.pop %v1534
      %v1536 = vmul.f32 %v1512, 1.442695
      %v1537 = vpow.pop %v1536
      %v1538 = vmul.f32 %v1513, 1.442695
      %v1539 = vpow.pop %v1538
      %v1540 = vmul.f32 %v1514, 1.442695
      %v1541 = vpow.pop %v1540
      %v1542 = vmul.f32 %v1515, 1.442695
      %v1543 = vpow.pop %v1542
      %v1544 = vmul.f32 %v1516, 1.442695
      %v1545 = vpow.pop %v1544
      %v1546 = vmul.f32 %v1517, 1.442695
      %v1547 = vpow.pop %v1546
      %v1548 = vmul.f32 %v1518, 1.442695
      %v1549 = vpow.pop %v1548
      %v1550 = vmul.f32 %v1519, 1.442695
      %v1551 = vpow.pop %v1550
      %v1552 = vadd.f32 %v1521, 1.0
      %v1553 = vadd.f32 %v1523, 1.0
      %v1554 = vadd.f32 %v1525, 1.0
      %v1555 = vadd.f32 %v1527, 1.0
      %v1556 = vadd.f32 %v1529, 1.0
      %v1557 = vadd.f32 %v1531, 1.0
      %v1558 = vadd.f32 %v1533, 1.0
      %v1559 = vadd.f32 %v1535, 1.0
      %v1560 = vadd.f32 %v1537, 1.0
      %v1561 = vadd.f32 %v1539, 1.0
      %v1562 = vadd.f32 %v1541, 1.0
      %v1563 = vadd.f32 %v1543, 1.0
      %v1564 = vadd.f32 %v1545, 1.0
      %v1565 = vadd.f32 %v1547, 1.0
      %v1566 = vadd.f32 %v1549, 1.0
      %v1567 = vadd.f32 %v1551, 1.0
      %v1568 = vrcp.pop %v1552
      %v1569 = vmul.f32 1.0, %v1568
      %v1570 = vrcp.pop %v1553
      %v1571 = vmul.f32 1.0, %v1570
      %v1572 = vrcp.pop %v1554
      %v1573 = vmul.f32 1.0, %v1572
      %v1574 = vrcp.pop %v1555
      %v1575 = vmul.f32 1.0, %v1574
      %v1576 = vrcp.pop %v1556
      %v1577 = vmul.f32 1.0, %v1576
      %v1578 = vrcp.pop %v1557
      %v1579 = vmul.f32 1.0, %v1578
      %v1580 = vrcp.pop %v1558
      %v1581 = vmul.f32 1.0, %v1580
      %v1582 = vrcp.pop %v1559
      %v1583 = vmul.f32 1.0, %v1582
      %v1584 = vrcp.pop %v1560
      %v1585 = vmul.f32 1.0, %v1584
      %v1586 = vrcp.pop %v1561
      %v1587 = vmul.f32 1.0, %v1586
      %v1588 = vrcp.pop %v1562
      %v1589 = vmul.f32 1.0, %v1588
      %v1590 = vrcp.pop %v1563
      %v1591 = vmul.f32 1.0, %v1590
      %v1592 = vrcp.pop %v1564
      %v1593 = vmul.f32 1.0, %v1592
      %v1594 = vrcp.pop %v1565
      %v1595 = vmul.f32 1.0, %v1594
      %v1596 = vrcp.pop %v1566
      %v1597 = vmul.f32 1.0, %v1596
      %v1598 = vrcp.pop %v1567
      %v1599 = vmul.f32 1.0, %v1598
      %v1600 = vxor.u32 %v1315, 2147483648
      %v1601 = vxor.u32 %v1319, 2147483648
      %v1602 = vxor.u32 %v1325, 2147483648
      %v1603 = vxor.u32 %v1329, 2147483648
      %v1604 = vxor.u32 %v1335, 2147483648
      %v1605 = vxor.u32 %v1339, 2147483648
      %v1606 = vxor.u32 %v1345, 2147483648
      %v1607 = vxor.u32 %v1349, 2147483648
      %v1608 = vxor.u32 %v1355, 2147483648
      %v1609 = vxor.u32 %v1359, 2147483648
      %v1610 = vxor.u32 %v1365, 2147483648
      %v1611 = vxor.u32 %v1369, 2147483648
      %v1612 = vxor.u32 %v1375, 2147483648
      %v1613 = vxor.u32 %v1379, 2147483648
      %v1614 = vxor.u32 %v1385, 2147483648
      %v1615 = vxor.u32 %v1389, 2147483648
      %v1616 = vmul.f32 %v1600, 1.442695
      %v1617 = vpow.pop %v1616
      %v1618 = vmul.f32 %v1601, 1.442695
      %v1619 = vpow.pop %v1618
      %v1620 = vmul.f32 %v1602, 1.442695
      %v1621 = vpow.pop %v1620
      %v1622 = vmul.f32 %v1603, 1.442695
      %v1623 = vpow.pop %v1622
      %v1624 = vmul.f32 %v1604, 1.442695
      %v1625 = vpow.pop %v1624
      %v1626 = vmul.f32 %v1605, 1.442695
      %v1627 = vpow.pop %v1626
      %v1628 = vmul.f32 %v1606, 1.442695
      %v1629 = vpow.pop %v1628
      %v1630 = vmul.f32 %v1607, 1.442695
      %v1631 = vpow.pop %v1630
      %v1632 = vmul.f32 %v1608, 1.442695
      %v1633 = vpow.pop %v1632
      %v1634 = vmul.f32 %v1609, 1.442695
      %v1635 = vpow.pop %v1634
      %v1636 = vmul.f32 %v1610, 1.442695
      %v1637 = vpow.pop %v1636
      %v1638 = vmul.f32 %v1611, 1.442695
      %v1639 = vpow.pop %v1638
      %v1640 = vmul.f32 %v1612, 1.442695
      %v1641 = vpow.pop %v1640
      %v1642 = vmul.f32 %v1613, 1.442695
      %v1643 = vpow.pop %v1642
      %v1644 = vmul.f32 %v1614, 1.442695
      %v1645 = vpow.pop %v1644
      %v1646 = vmul.f32 %v1615, 1.442695
      %v1647 = vpow.pop %v1646
      %v1648 = vadd.f32 %v1617, 1.0
      %v1649 = vadd.f32 %v1619, 1.0
      %v1650 = vadd.f32 %v1621, 1.0
      %v1651 = vadd.f32 %v1623, 1.0
      %v1652 = vadd.f32 %v1625, 1.0
      %v1653 = vadd.f32 %v1627, 1.0
      %v1654 = vadd.f32 %v1629, 1.0
      %v1655 = vadd.f32 %v1631, 1.0
      %v1656 = vadd.f32 %v1633, 1.0
      %v1657 = vadd.f32 %v1635, 1.0
      %v1658 = vadd.f32 %v1637, 1.0
      %v1659 = vadd.f32 %v1639, 1.0
      %v1660 = vadd.f32 %v1641, 1.0
      %v1661 = vadd.f32 %v1643, 1.0
      %v1662 = vadd.f32 %v1645, 1.0
      %v1663 = vadd.f32 %v1647, 1.0
      %v1664 = vrcp.pop %v1648
      %v1665 = vmul.f32 1.0, %v1664
      %v1666 = vrcp.pop %v1649
      %v1667 = vmul.f32 1.0, %v1666
      %v1668 = vrcp.pop %v1650
      %v1669 = vmul.f32 1.0, %v1668
      %v1670 = vrcp.pop %v1651
      %v1671 = vmul.f32 1.0, %v1670
      %v1672 = vrcp.pop %v1652
      %v1673 = vmul.f32 1.0, %v1672
      %v1674 = vrcp.pop %v1653
      %v1675 = vmul.f32 1.0, %v1674
      %v1676 = vrcp.pop %v1654
      %v1677 = vmul.f32 1.0, %v1676
      %v1678 = vrcp.pop %v1655
      %v1679 = vmul.f32 1.0, %v1678
      %v1680 = vrcp.pop %v1656
      %v1681 = vmul.f32 1.0, %v1680
      %v1682 = vrcp.pop %v1657
      %v1683 = vmul.f32 1.0, %v1682
      %v1684 = vrcp.pop %v1658
      %v1685 = vmul.f32 1.0, %v1684
      %v1686 = vrcp.pop %v1659
      %v1687 = vmul.f32 1.0, %v1686
      %v1688 = vrcp.pop %v1660
      %v1689 = vmul.f32 1.0, %v1688
      %v1690 = vrcp.pop %v1661
      %v1691 = vmul.f32 1.0, %v1690
      %v1692 = vrcp.pop %v1662
      %v1693 = vmul.f32 1.0, %v1692
      %v1694 = vrcp.pop %v1663
      %v1695 = vmul.f32 1.0, %v1694
      %v1696 = vmul.f32 %v1569, %v1428
      %v1697 = vmul.f32 %v1571, %v1432
      %v1698 = vmul.f32 %v1573, %v1438
      %v1699 = vmul.f32 %v1575, %v1442
      %v1700 = vmul.f32 %v1577, %v1448
      %v1701 = vmul.f32 %v1579, %v1452
      %v1702 = vmul.f32 %v1581, %v1458
      %v1703 = vmul.f32 %v1583, %v1462
      %v1704 = vmul.f32 %v1585, %v1468
      %v1705 = vmul.f32 %v1587, %v1472
      %v1706 = vmul.f32 %v1589, %v1478
      %v1707 = vmul.f32 %v1591, %v1482
      %v1708 = vmul.f32 %v1593, %v1488
      %v1709 = vmul.f32 %v1595, %v1492
      %v1710 = vmul.f32 %v1597, %v1498
      %v1711 = vmul.f32 %v1599, %v1502
      %v1712 = vadd.f32 %v1426, %v1696
      %v1713 = vadd.f32 %v1430, %v1697
      %v1714 = vadd.f32 %v1436, %v1698
      %v1715 = vadd.f32 %v1440, %v1699
      %v1716 = vadd.f32 %v1446, %v1700
      %v1717 = vadd.f32 %v1450, %v1701
      %v1718 = vadd.f32 %v1456, %v1702
      %v1719 = vadd.f32 %v1460, %v1703
      %v1720 = vadd.f32 %v1466, %v1704
      %v1721 = vadd.f32 %v1470, %v1705
      %v1722 = vadd.f32 %v1476, %v1706
      %v1723 = vadd.f32 %v1480, %v1707
      %v1724 = vadd.f32 %v1486, %v1708
      %v1725 = vadd.f32 %v1490, %v1709
      %v1726 = vadd.f32 %v1496, %v1710
      %v1727 = vadd.f32 %v1500, %v1711
      %v1728 = vtanh.pop %v1712
      %v1729 = vtanh.pop %v1713
      %v1730 = vtanh.pop %v1714
      %v1731 = vtanh.pop %v1715
      %v1732 = vtanh.pop %v1716
      %v1733 = vtanh.pop %v1717
      %v1734 = vtanh.pop %v1718
      %v1735 = vtanh.pop %v1719
      %v1736 = vtanh.pop %v1720
      %v1737 = vtanh.pop %v1721
      %v1738 = vtanh.pop %v1722
      %v1739 = vtanh.pop %v1723
      %v1740 = vtanh.pop %v1724
      %v1741 = vtanh.pop %v1725
      %v1742 = vtanh.pop %v1726
      %v1743 = vtanh.pop %v1727
      %v1744 = vsub.f32 1.0, %v1665
      %v1745 = vsub.f32 1.0, %v1667
      %v1746 = vsub.f32 1.0, %v1669
      %v1747 = vsub.f32 1.0, %v1671
      %v1748 = vsub.f32 1.0, %v1673
      %v1749 = vsub.f32 1.0, %v1675
      %v1750 = vsub.f32 1.0, %v1677
      %v1751 = vsub.f32 1.0, %v1679
      %v1752 = vsub.f32 1.0, %v1681
      %v1753 = vsub.f32 1.0, %v1683
      %v1754 = vsub.f32 1.0, %v1685
      %v1755 = vsub.f32 1.0, %v1687
      %v1756 = vsub.f32 1.0, %v1689
      %v1757 = vsub.f32 1.0, %v1691
      %v1758 = vsub.f32 1.0, %v1693
      %v1759 = vsub.f32 1.0, %v1695
      %v1760 = vmul.f32 %v1744, %v1728
      %v1761 = vmul.f32 %v1745, %v1729
      %v1762 = vmul.f32 %v1746, %v1730
      %v1763 = vmul.f32 %v1747, %v1731
      %v1764 = vmul.f32 %v1748, %v1732
      %v1765 = vmul.f32 %v1749, %v1733
      %v1766 = vmul.f32 %v1750, %v1734
      %v1767 = vmul.f32 %v1751, %v1735
      %v1768 = vmul.f32 %v1752, %v1736
      %v1769 = vmul.f32 %v1753, %v1737
      %v1770 = vmul.f32 %v1754, %v1738
      %v1771 = vmul.f32 %v1755, %v1739
      %v1772 = vmul.f32 %v1756, %v1740
      %v1773 = vmul.f32 %v1757, %v1741
      %v1774 = vmul.f32 %v1758, %v1742
      %v1775 = vmul.f32 %v1759, %v1743
      %v1776 = vmul.f32 %v1665, %v392
      %v1777 = vmul.f32 %v1667, %v393
      %v1778 = vmul.f32 %v1669, %v394
      %v1779 = vmul.f32 %v1671, %v395
      %v1780 = vmul.f32 %v1673, %v396
      %v1781 = vmul.f32 %v1675, %v397
      %v1782 = vmul.f32 %v1677, %v398
      %v1783 = vmul.f32 %v1679, %v399
      %v1784 = vmul.f32 %v1681, %v400
      %v1785 = vmul.f32 %v1683, %v401
      %v1786 = vmul.f32 %v1685, %v402
      %v1787 = vmul.f32 %v1687, %v403
      %v1788 = vmul.f32 %v1689, %v404
      %v1789 = vmul.f32 %v1691, %v405
      %v1790 = vmul.f32 %v1693, %v406
      %v1791 = vmul.f32 %v1695, %v407
      %v1792 = vadd.f32 %v1760, %v1776
      %v1793 = vadd.f32 %v1761, %v1777
      %v1794 = vadd.f32 %v1762, %v1778
      %v1795 = vadd.f32 %v1763, %v1779
      %v1796 = vadd.f32 %v1764, %v1780
      %v1797 = vadd.f32 %v1765, %v1781
      %v1798 = vadd.f32 %v1766, %v1782
      %v1799 = vadd.f32 %v1767, %v1783
      %v1800 = vadd.f32 %v1768, %v1784
      %v1801 = vadd.f32 %v1769, %v1785
      %v1802 = vadd.f32 %v1770, %v1786
      %v1803 = vadd.f32 %v1771, %v1787
      %v1804 = vadd.f32 %v1772, %v1788
      %v1805 = vadd.f32 %v1773, %v1789
      %v1806 = vadd.f32 %v1774, %v1790
      %v1807 = vadd.f32 %v1775, %v1791
      %1808 = vst [vmem:[#allocation13] sm:$0xff] %v1792
      %1809 = vst [vmem:[#allocation13 + $0x8] sm:$0xff] %v1793
      %1810 = vst [vmem:[#allocation13 + $0x10] sm:$0xff] %v1794
      %1811 = vst [vmem:[#allocation13 + $0x18] sm:$0xff] %v1795
      %1812 = vst [vmem:[#allocation13 + $0x20] sm:$0xff] %v1796
      %1813 = vst [vmem:[#allocation13 + $0x28] sm:$0xff] %v1797
      %1814 = vst [vmem:[#allocation13 + $0x30] sm:$0xff] %v1798
      %1815 = vst [vmem:[#allocation13 + $0x38] sm:$0xff] %v1799
      %1816 = vst [vmem:[#allocation13 + $0x40] sm:$0xff] %v1800
      %1817 = vst [vmem:[#allocation13 + $0x48] sm:$0xff] %v1801
      %1818 = vst [vmem:[#allocation13 + $0x50] sm:$0xff] %v1802
      %1819 = vst [vmem:[#allocation13 + $0x58] sm:$0xff] %v1803
      %1820 = vst [vmem:[#allocation13 + $0x60] sm:$0xff] %v1804
      %1821 = vst [vmem:[#allocation13 + $0x68] sm:$0xff] %v1805
      %1822 = vst [vmem:[#allocation13 + $0x70] sm:$0xff] %v1806
      %1823 = vst [vmem:[#allocation13 + $0x78] sm:$0xff] %v1807
    $region57: #{tpu_custom_call.1} parent=1 // pred_fallthru
      _
    // Predicated region
    $region58: #{tpu_custom_call.1} parent=1 // pred_check
      _
    $region59: #{tpu_custom_call.1} parent=1 // pred_check_branch
      %1825 = sbr.rel (0) target = $region61
    $region60: #{tpu_custom_call.1} parent=1 // pred_region
      %s1827 = ssub.s32 2048, 2048
      %1828 = vsyncadd [#allocation6], %s1827
      %s1829 = sshll.u32 [#allocation13], 4
      %s1830 = int_to_ptr.vmem [resolvable:$true] %s1829
      %1835 = dma.vmem_to_hbm [thread:$0]  %s1830, 2048, %s7, [#allocation6], 128, 128, 8
    $region61: #{tpu_custom_call.1} parent=1 // pred_fallthru
      _
    // Predicated region
    $region62: #{tpu_custom_call.1} parent=1 // pred_check
      _
    $region63: #{tpu_custom_call.1} parent=1 // pred_check_branch
      %1837 = sbr.rel (0) target = $region65
    $region64: #{tpu_custom_call.1} parent=1 // pred_region
      %1838 = dma.done [#allocation6], 2048
    $region65: #{tpu_custom_call.1} parent=1 // pred_fallthru
      _
    %1839 = vsyncpa [#allocation5], 1
    %1840 = vsyncpa [#allocation8], 1
    %1841 = vsyncpa [#allocation11], 1
    %1842 = vsyncpa [#allocation6], 1

</llo_original>
